<compile_context>
chip_gen: v7x
topology: tpu7x:2x2x1
jax: 0.10.0
libtpu: 0.0.40
codegen_flags: <defaults>
</compile_context>

<pallas_src>
import numpy as np
import jax
import jax.numpy as jnp
from jax.experimental import pallas as pl
from jax.experimental.pallas import tpu as pltpu

PATCH = 16            # stand-in for the 224x224 crop fed to the CNN
S = PATCH * PATCH     # flattened spatial size per patch
C = 3                 # RGB
FEAT = 128            # stand-in for resnet101's 2048-dim flattened feature
CP = 8                # patches per in-kernel chunk (keeps f32 intermediate ~1 MiB)


# ----------------------------------------------------------------------------
# grid_edge_index_calc: plain numpy glue, faithful port of the torch version.
# ----------------------------------------------------------------------------
def grid_edge_index_calc(grid_height, grid_width, diags=False):
    edge_list = []
    n = grid_height * grid_width
    corners = [0, grid_width - 1, n - grid_width, n - 1]
    for i in range(n):
        if i in corners:
            if i == 0:
                edge_list.append([i, 1])
                edge_list.append([i, grid_width])
                if diags:
                    edge_list.append([i, grid_width + 1])
            elif i == grid_width - 1:
                edge_list.append([i, grid_width - 2])
                edge_list.append([i, 2 * grid_width - 1])
                if diags:
                    edge_list.append([i, 2 * grid_width - 2])
            elif i == n - grid_width:
                edge_list.append([i, n - 2 * grid_width])
                edge_list.append([i, n - grid_width + 1])
                if diags:
                    edge_list.append([i, n - 2 * grid_width + 1])
            elif i == n - 1:
                edge_list.append([i, n - 2])
                edge_list.append([i, n - 1 - grid_width])
                if diags:
                    edge_list.append([i, n - grid_width - 2])
        elif i in range(1, grid_width - 1):
            edge_list += [[i, i - 1], [i, i + 1], [i, i + grid_width]]
            if diags:
                edge_list += [[i, i + grid_width - 1], [i, i + grid_width + 1]]
        elif i in range(n - grid_width, n):
            edge_list += [[i, i - 1], [i, i + 1], [i, i - grid_width]]
            if diags:
                edge_list += [[i, i - grid_width - 1], [i, i - grid_width + 1]]
        elif i % grid_width == 0:
            edge_list += [[i, i + 1], [i, i - grid_width], [i, i + grid_width]]
            if diags:
                edge_list += [[i, i - grid_width + 1], [i, i + grid_width + 1]]
        elif (i + 1) % grid_width == 0:
            edge_list += [[i, i - 1], [i, i - grid_width], [i, i + grid_width]]
            if diags:
                edge_list += [[i, i - grid_width - 1], [i, i + grid_width - 1]]
        else:
            edge_list += [[i, i - 1], [i, i + 1], [i, i - grid_width], [i, i + grid_width]]
            if diags:
                edge_list += [[i, i - grid_width - 1], [i, i - grid_width + 1],
                              [i, i + grid_width - 1], [i, i + grid_width + 1]]
    edge = np.asarray(edge_list, dtype=np.int32).T
    if diags:
        expected = (8 * (grid_width - 2) * (grid_height - 2)
                    + 2 * 5 * (grid_width - 2) + 2 * 5 * (grid_height - 2) + 4 * 3)
    else:
        expected = (4 * (grid_width - 2) * (grid_height - 2)
                    + 2 * 3 * (grid_width - 2) + 2 * 3 * (grid_height - 2) + 4 * 2)
    assert edge.shape[1] == expected, "Wrong number of fixed grid edges"
    return edge


# ----------------------------------------------------------------------------
# Pallas kernel: batched patches -> (folded normalize) matmul -> relu -> GAP.
# ----------------------------------------------------------------------------
def _make_backbone_kernel(tn):
    n_chunks = tn // CP

    def kernel(x_ref, w_ref, b_ref, o_ref):
        # x_ref: (TN, S, C)   bf16  patch pixels, channel-minor
        # w_ref: (C, FEAT)    bf16  normalization-folded pointwise weights
        # b_ref: (1, FEAT)    f32   normalization-folded bias
        # o_ref: (TN, FEAT)   f32   per-patch feature rows (lane-dense)
        w = w_ref[...]
        b = b_ref[...]

        def chunk(c, carry):
            start = pl.multiple_of(c * CP, CP)
            xm = x_ref[pl.ds(start, CP), :, :].reshape(CP * S, C)           # bf16
            h = jnp.dot(xm, w, preferred_element_type=jnp.float32)          # (CP*S, FEAT) f32
            h = jnp.maximum(h + b, 0.0)                                     # bias + relu
            f = jnp.sum(h.reshape(CP, S, FEAT), axis=1) * (1.0 / S)         # sublane GAP
            o_ref[pl.ds(start, CP), :] = f
            return carry

        if n_chunks == 1:
            chunk(0, 0)
        else:
            jax.lax.fori_loop(0, n_chunks, chunk, 0, unroll=(n_chunks <= 8))

    return kernel


def image_transform_forward(images, w, graph_size, batch_size):
    """images: (B, H, W, 3) pixel values in [0, 255]; H = W = grid*PATCH.
       (The module itself divides by 255 before Normalize; that /255 is folded
        into the weights here.)

    Returns (image_tensor, i_graph):
      image_tensor: (B, grid*grid, FEAT) float32
      i_graph:      (batch_size, 2, E)   int32
    """
    B, H, W, Cin = images.shape
    grid = int(np.ceil(np.sqrt(graph_size)))
    assert H == grid * PATCH and W == grid * PATCH and Cin == C

    # --- patchify channel-minor: no HWC->CHW full-array transpose -----------
    x = images.reshape(B, grid, PATCH, grid, PATCH, C)
    x = jnp.transpose(x, (0, 1, 3, 2, 4, 5))                 # (B, gh, gw, P, P, C)
    N = B * grid * grid
    x = x.reshape(N, S, C).astype(jnp.bfloat16)              # (N, S, C) bf16

    # --- fold  (x/255 - mean)/std  into the pointwise backbone weights ------
    mean = jnp.array([0.485, 0.456, 0.406], jnp.float32)
    std = jnp.array([0.229, 0.224, 0.225], jnp.float32)
    wf = w.astype(jnp.float32)                                # (FEAT, C)
    w_fold = (wf / (255.0 * std)[None, :]).T.astype(jnp.bfloat16)   # (C, FEAT)
    b_fold = (-(wf @ (mean / std))).reshape(1, FEAT).astype(jnp.float32)

    # --- tile choice: TN patches per grid step (multiple of 8) --------------
    if N >= 256:
        TN = 256
    else:
        TN = max(CP, ((N + CP - 1) // CP) * CP)
    N_pad = ((N + TN - 1) // TN) * TN
    if N_pad != N:
        x = jnp.pad(x, ((0, N_pad - N), (0, 0), (0, 0)))

    cost = pl.CostEstimate(
        flops=2 * N_pad * S * C * FEAT,
        transcendentals=0,
        bytes_accessed=(N_pad * S * C * 2 + N_pad * FEAT * 4
                        + C * FEAT * 2 + FEAT * 4),
    )

    out = pl.pallas_call(
        _make_backbone_kernel(TN),
        out_shape=jax.ShapeDtypeStruct((N_pad, FEAT), jnp.float32),
        grid_spec=pltpu.PrefetchScalarGridSpec(
            num_scalar_prefetch=0,
            grid=(N_pad // TN,),
            in_specs=[
                pl.BlockSpec((TN, S, C), lambda i: (i, 0, 0)),   # TN patches / step
                pl.BlockSpec((C, FEAT), lambda i: (0, 0)),       # folded weights
                pl.BlockSpec((1, FEAT), lambda i: (0, 0)),       # folded bias
            ],
            out_specs=pl.BlockSpec((TN, FEAT), lambda i: (i, 0)),
        ),
        compiler_params=pltpu.CompilerParams(
            dimension_semantics=("parallel",)),
        cost_estimate=cost,
    )(x, w_fold, b_fold)

    image_tensor = out[:N].reshape(B, grid * grid, FEAT)      # torch.stack equivalent

    edge = grid_edge_index_calc(grid, grid)                   # (2, E)
    i_graph = jnp.broadcast_to(jnp.asarray(edge)[None],
                               (batch_size, 2, edge.shape[1]))  # unsqueeze+expand
    return image_tensor, i_graph


if __name__ == "__main__":
    graph_size = 4          # grid = ceil(sqrt(4)) = 2  ->  4 patches / image
    batch_size = 2
    grid = int(np.ceil(np.sqrt(graph_size)))

    key = jax.random.PRNGKey(0)
    k_img, k_w = jax.random.split(key)
    # pixel values in [0, 255] (the module divides by 255 itself before Normalize)
    images = jax.random.uniform(k_img, (batch_size, grid * PATCH, grid * PATCH, 3),
                                dtype=jnp.float32) * 255.0
    # deterministic synthetic backbone weights (stand-in for resnet101)
    w = jax.random.normal(k_w, (FEAT, 3), dtype=jnp.float32) * 0.1

    image_tensor, i_graph = image_transform_forward(images, w, graph_size, batch_size)
    image_tensor = jax.block_until_ready(image_tensor)
    i_graph = jax.block_until_ready(i_graph)

    assert image_tensor.shape == (batch_size, grid * grid, FEAT)
    assert i_graph.shape == (batch_size, 2, 8)  # 2x2 grid -> 8 edges
    assert bool(jnp.all(jnp.isfinite(image_tensor)))
    print("KERNEL_OK")
</pallas_src>

<mosaic_0001>
module attributes {stable_mosaic.version = 11 : i64} {
  func.func @kernel(%arg0: i32, %arg1: memref<8x256x3xbf16, #tpu.memory_space<vmem>>, %arg2: memref<3x128xbf16, #tpu.memory_space<vmem>>, %arg3: memref<1x128xf32, #tpu.memory_space<vmem>>, %arg4: memref<8x128xf32, #tpu.memory_space<vmem>>) attributes {dimension_semantics = [#tpu.dimension_semantics<parallel>], iteration_bounds = array<i64: 1>, scalar_prefetch = 0 : i64, scratch_operands = 0 : i64, tpu.core_type = #tpu.core_type<tc>, window_params = [{transform_indices = @transform_0, window_bounds = array<i64: 8, 256, 3>}, {pipeline_mode = #tpu.pipeline_mode<synchronous>, transform_indices = @transform_1, window_bounds = array<i64: 3, 128>}, {pipeline_mode = #tpu.pipeline_mode<synchronous>, transform_indices = @transform_2, window_bounds = array<i64: 1, 128>}, {transform_indices = @transform_3, window_bounds = array<i64: 8, 128>}]} {
    %c0 = arith.constant 0 : index
    %c0_0 = arith.constant 0 : index
    %0 = vector.load %arg2[%c0, %c0_0] : memref<3x128xbf16, #tpu.memory_space<vmem>>, vector<3x128xbf16>
    %c0_1 = arith.constant 0 : index
    %c0_2 = arith.constant 0 : index
    %1 = vector.load %arg3[%c0_1, %c0_2] : memref<1x128xf32, #tpu.memory_space<vmem>>, vector<1x128xf32>
    %c0_i32 = arith.constant 0 : i32
    %2 = tpu.assume_multiple %c0_i32, 8 : i32
    %3 = arith.index_cast %2 : i32 to index
    %c0_3 = arith.constant 0 : index
    %c0_4 = arith.constant 0 : index
    %4 = vector.load %arg1[%3, %c0_3, %c0_4] : memref<8x256x3xbf16, #tpu.memory_space<vmem>>, vector<8x256x3xbf16>
    %5 = vector.shape_cast %4 : vector<8x256x3xbf16> to vector<2048x3xbf16>
    %cst = arith.constant dense<0.000000e+00> : vector<2048x128xf32>
    %6 = tpu.matmul %5, %0, %cst {dimension_numbers = #tpu.dot_dimension_numbers<[1], [0], [0], [1], [0, 0, 1, 1], [], []>} : vector<2048x3xbf16>, vector<3x128xbf16>, vector<2048x128xf32> -> vector<2048x128xf32>
    %7 = vector.broadcast %1 : vector<1x128xf32> to vector<2048x128xf32>
    %8 = arith.addf %6, %7 : vector<2048x128xf32>
    %cst_5 = arith.constant 0.000000e+00 : f32
    %9 = vector.broadcast %cst_5 : f32 to vector<2048x128xf32>
    %10 = arith.maximumf %8, %9 : vector<2048x128xf32>
    %11 = vector.shape_cast %10 : vector<2048x128xf32> to vector<8x256x128xf32>
    %cst_6 = arith.constant dense<0.000000e+00> : vector<8x128xf32>
    %12 = vector.multi_reduction <add>, %11, %cst_6 [1] : vector<8x256x128xf32> to vector<8x128xf32>
    %cst_7 = arith.constant 3.906250e-03 : f32
    %13 = vector.broadcast %cst_7 : f32 to vector<8x128xf32>
    %14 = arith.mulf %12, %13 : vector<8x128xf32>
    %15 = arith.index_cast %2 : i32 to index
    %c0_8 = arith.constant 0 : index
    %16 = vector.load %arg4[%15, %c0_8] : memref<8x128xf32, #tpu.memory_space<vmem>>, vector<8x128xf32>
    tpu.vector_store %arg4[%15, %c0_8], %14 {strides = array<i32>} : memref<8x128xf32, #tpu.memory_space<vmem>>, vector<8x128xf32>,
    return
  }
  func.func @transform_0(%arg0: i32) -> (i32, i32, i32) {
    %c0_i32 = arith.constant 0 : i32
    %c0_i32_0 = arith.constant 0 : i32
    %c0_i32_1 = arith.constant 0 : i32
    return %arg0, %c0_i32, %c0_i32_0 : i32, i32, i32
  }
  func.func @transform_1(%arg0: i32) -> (i32, i32) {
    %c0_i32 = arith.constant 0 : i32
    %c0_i32_0 = arith.constant 0 : i32
    %c0_i32_1 = arith.constant 0 : i32
    return %c0_i32, %c0_i32_0 : i32, i32
  }
  func.func @transform_2(%arg0: i32) -> (i32, i32) {
    %c0_i32 = arith.constant 0 : i32
    %c0_i32_0 = arith.constant 0 : i32
    %c0_i32_1 = arith.constant 0 : i32
    return %c0_i32, %c0_i32_0 : i32, i32
  }
  func.func @transform_3(%arg0: i32) -> (i32, i32) {
    %c0_i32 = arith.constant 0 : i32
    %c0_i32_0 = arith.constant 0 : i32
    return %arg0, %c0_i32 : i32, i32
  }
}

</mosaic_0001>

<llo_original>
// kernel: tpu_custom_call.1
$region0: #{tpu_custom_call.1}
  #allocation0 [shape = 'u32[]', space=smem, size = 0x4, offset = 0x4, fixed_abs, tag = 'smem constant byte address 0x4 - core index']
  #allocation1 [shape = 'u32[144,128]{1,0:T(1,128)}', space=vmem, size = 0x12000, scoped, tag = 'internal scratch']
  %s0 = inlined_call_operand.vmem [shape: bf16[8,256,3], index: 0, kind: input, shape index: {}]
  %s1 = inlined_call_operand.vmem [shape: bf16[3,128], index: 1, kind: input, shape index: {}]
  %s2 = inlined_call_operand.vmem [shape: f32[1,128], index: 2, kind: input, shape index: {}]
  %s3 = inlined_call_operand.hbm [shape: f32[8,128], index: 3, kind: output, shape index: {}]
  %s4 = sld [smem:[#allocation0]]
  $region22: #{tpu_custom_call.1} parent=0
    _
  %s6 = ssub.s32 1, %s4
  %s7 = scalar_select 0, %s6, %s4
  $region1: #{tpu_custom_call.1} parent=0
    #allocation2 [shape = 'u8[4096]{0}', space=vmem, size = 0x1000, scoped, tag = 'output window, operand 0, single buffered']
    #allocation3 [shape = 's32[1]{0}', space=sflag, size = 0x4, scoped, tag = 'scoped memory for tpu_custom_call.1']
    %8 = vsyncpa [#allocation3], 0
    // Predicated region
    $region2: #{tpu_custom_call.1} parent=1 // pred_check
      _
    $region3: #{tpu_custom_call.1} parent=1 // pred_check_branch
      %10 = sbr.rel (0) target = $region5
    $region4: #{tpu_custom_call.1} parent=1 // pred_region
      _
    $region5: #{tpu_custom_call.1} parent=1 // pred_fallthru
      _
    // Predicated region
    $region6: #{tpu_custom_call.1} parent=1 // pred_check
      _
    $region7: #{tpu_custom_call.1} parent=1 // pred_check_branch
      %12 = sbr.rel (0) target = $region9
    $region8: #{tpu_custom_call.1} parent=1 // pred_region
      _
    $region9: #{tpu_custom_call.1} parent=1 // pred_fallthru
      _
    // Predicated region
    $region10: #{tpu_custom_call.1} parent=1 // pred_check
      _
    $region11: #{tpu_custom_call.1} parent=1 // pred_check_branch
      %14 = sbr.rel (0) target = $region13
    $region12: #{tpu_custom_call.1} parent=1 // pred_region
      _
    $region13: #{tpu_custom_call.1} parent=1 // pred_fallthru
      _
    %v16 = vld [vmem:[%s1] sm:$0x3]
    %v17 = vld [vmem:[%s2] sm:$0x1]
    %s18 = smul.u32 0, 32
    %s19 = smul.addr %s18, 4
    %s20 = scalar_lea.vmem %s0, %s19
    %v21 = vld [vmem:[%s20] sm:$0xf]
    %v22 = vld [vmem:[%s20 + $0x4] sm:$0xf]
    %v23 = vld [vmem:[%s20 + $0x8] sm:$0xf]
    %v24 = vld [vmem:[%s20 + $0xc] sm:$0xf]
    %v25 = vld [vmem:[%s20 + $0x10] sm:$0xf]
    %v26 = vld [vmem:[%s20 + $0x14] sm:$0xf]
    %v27 = vld [vmem:[%s20 + $0x18] sm:$0xf]
    %v28 = vld [vmem:[%s20 + $0x1c] sm:$0xf]
    %v29 = vld [vmem:[%s20 + $0x20] sm:$0xf]
    %v30 = vld [vmem:[%s20 + $0x24] sm:$0xf]
    %v31 = vld [vmem:[%s20 + $0x28] sm:$0xf]
    %v32 = vld [vmem:[%s20 + $0x2c] sm:$0xf]
    %v33 = vld [vmem:[%s20 + $0x30] sm:$0xf]
    %v34 = vld [vmem:[%s20 + $0x34] sm:$0xf]
    %v35 = vld [vmem:[%s20 + $0x38] sm:$0xf]
    %v36 = vld [vmem:[%s20 + $0x3c] sm:$0xf]
    %v37 = vld [vmem:[%s20 + $0x40] sm:$0xf]
    %v38 = vld [vmem:[%s20 + $0x44] sm:$0xf]
    %v39 = vld [vmem:[%s20 + $0x48] sm:$0xf]
    %v40 = vld [vmem:[%s20 + $0x4c] sm:$0xf]
    %v41 = vld [vmem:[%s20 + $0x50] sm:$0xf]
    %v42 = vld [vmem:[%s20 + $0x54] sm:$0xf]
    %v43 = vld [vmem:[%s20 + $0x58] sm:$0xf]
    %v44 = vld [vmem:[%s20 + $0x5c] sm:$0xf]
    %v45 = vld [vmem:[%s20 + $0x60] sm:$0xf]
    %v46 = vld [vmem:[%s20 + $0x64] sm:$0xf]
    %v47 = vld [vmem:[%s20 + $0x68] sm:$0xf]
    %v48 = vld [vmem:[%s20 + $0x6c] sm:$0xf]
    %v49 = vld [vmem:[%s20 + $0x70] sm:$0xf]
    %v50 = vld [vmem:[%s20 + $0x74] sm:$0xf]
    %v51 = vld [vmem:[%s20 + $0x78] sm:$0xf]
    %v52 = vld [vmem:[%s20 + $0x7c] sm:$0xf]
    %v53 = vld [vmem:[%s20 + $0x80] sm:$0xf]
    %v54 = vld [vmem:[%s20 + $0x84] sm:$0xf]
    %v55 = vld [vmem:[%s20 + $0x88] sm:$0xf]
    %v56 = vld [vmem:[%s20 + $0x8c] sm:$0xf]
    %v57 = vld [vmem:[%s20 + $0x90] sm:$0xf]
    %v58 = vld [vmem:[%s20 + $0x94] sm:$0xf]
    %v59 = vld [vmem:[%s20 + $0x98] sm:$0xf]
    %v60 = vld [vmem:[%s20 + $0x9c] sm:$0xf]
    %v61 = vld [vmem:[%s20 + $0xa0] sm:$0xf]
    %v62 = vld [vmem:[%s20 + $0xa4] sm:$0xf]
    %v63 = vld [vmem:[%s20 + $0xa8] sm:$0xf]
    %v64 = vld [vmem:[%s20 + $0xac] sm:$0xf]
    %v65 = vld [vmem:[%s20 + $0xb0] sm:$0xf]
    %v66 = vld [vmem:[%s20 + $0xb4] sm:$0xf]
    %v67 = vld [vmem:[%s20 + $0xb8] sm:$0xf]
    %v68 = vld [vmem:[%s20 + $0xbc] sm:$0xf]
    %v69 = vld [vmem:[%s20 + $0xc0] sm:$0xf]
    %v70 = vld [vmem:[%s20 + $0xc4] sm:$0xf]
    %v71 = vld [vmem:[%s20 + $0xc8] sm:$0xf]
    %v72 = vld [vmem:[%s20 + $0xcc] sm:$0xf]
    %v73 = vld [vmem:[%s20 + $0xd0] sm:$0xf]
    %v74 = vld [vmem:[%s20 + $0xd4] sm:$0xf]
    %v75 = vld [vmem:[%s20 + $0xd8] sm:$0xf]
    %v76 = vld [vmem:[%s20 + $0xdc] sm:$0xf]
    %v77 = vld [vmem:[%s20 + $0xe0] sm:$0xf]
    %v78 = vld [vmem:[%s20 + $0xe4] sm:$0xf]
    %v79 = vld [vmem:[%s20 + $0xe8] sm:$0xf]
    %v80 = vld [vmem:[%s20 + $0xec] sm:$0xf]
    %v81 = vld [vmem:[%s20 + $0xf0] sm:$0xf]
    %v82 = vld [vmem:[%s20 + $0xf4] sm:$0xf]
    %v83 = vld [vmem:[%s20 + $0xf8] sm:$0xf]
    %v84 = vld [vmem:[%s20 + $0xfc] sm:$0xf]
    %v85 = vld [vmem:[%s20 + $0x100] sm:$0xf]
    %v86 = vld [vmem:[%s20 + $0x104] sm:$0xf]
    %v87 = vld [vmem:[%s20 + $0x108] sm:$0xf]
    %v88 = vld [vmem:[%s20 + $0x10c] sm:$0xf]
    %v89 = vld [vmem:[%s20 + $0x110] sm:$0xf]
    %v90 = vld [vmem:[%s20 + $0x114] sm:$0xf]
    %v91 = vld [vmem:[%s20 + $0x118] sm:$0xf]
    %v92 = vld [vmem:[%s20 + $0x11c] sm:$0xf]
    %v93 = vld [vmem:[%s20 + $0x120] sm:$0xf]
    %v94 = vld [vmem:[%s20 + $0x124] sm:$0xf]
    %v95 = vld [vmem:[%s20 + $0x128] sm:$0xf]
    %v96 = vld [vmem:[%s20 + $0x12c] sm:$0xf]
    %v97 = vld [vmem:[%s20 + $0x130] sm:$0xf]
    %v98 = vld [vmem:[%s20 + $0x134] sm:$0xf]
    %v99 = vld [vmem:[%s20 + $0x138] sm:$0xf]
    %v100 = vld [vmem:[%s20 + $0x13c] sm:$0xf]
    %v101 = vld [vmem:[%s20 + $0x140] sm:$0xf]
    %v102 = vld [vmem:[%s20 + $0x144] sm:$0xf]
    %v103 = vld [vmem:[%s20 + $0x148] sm:$0xf]
    %v104 = vld [vmem:[%s20 + $0x14c] sm:$0xf]
    %v105 = vld [vmem:[%s20 + $0x150] sm:$0xf]
    %v106 = vld [vmem:[%s20 + $0x154] sm:$0xf]
    %v107 = vld [vmem:[%s20 + $0x158] sm:$0xf]
    %v108 = vld [vmem:[%s20 + $0x15c] sm:$0xf]
    %v109 = vld [vmem:[%s20 + $0x160] sm:$0xf]
    %v110 = vld [vmem:[%s20 + $0x164] sm:$0xf]
    %v111 = vld [vmem:[%s20 + $0x168] sm:$0xf]
    %v112 = vld [vmem:[%s20 + $0x16c] sm:$0xf]
    %v113 = vld [vmem:[%s20 + $0x170] sm:$0xf]
    %v114 = vld [vmem:[%s20 + $0x174] sm:$0xf]
    %v115 = vld [vmem:[%s20 + $0x178] sm:$0xf]
    %v116 = vld [vmem:[%s20 + $0x17c] sm:$0xf]
    %v117 = vld [vmem:[%s20 + $0x180] sm:$0xf]
    %v118 = vld [vmem:[%s20 + $0x184] sm:$0xf]
    %v119 = vld [vmem:[%s20 + $0x188] sm:$0xf]
    %v120 = vld [vmem:[%s20 + $0x18c] sm:$0xf]
    %v121 = vld [vmem:[%s20 + $0x190] sm:$0xf]
    %v122 = vld [vmem:[%s20 + $0x194] sm:$0xf]
    %v123 = vld [vmem:[%s20 + $0x198] sm:$0xf]
    %v124 = vld [vmem:[%s20 + $0x19c] sm:$0xf]
    %v125 = vld [vmem:[%s20 + $0x1a0] sm:$0xf]
    %v126 = vld [vmem:[%s20 + $0x1a4] sm:$0xf]
    %v127 = vld [vmem:[%s20 + $0x1a8] sm:$0xf]
    %v128 = vld [vmem:[%s20 + $0x1ac] sm:$0xf]
    %v129 = vld [vmem:[%s20 + $0x1b0] sm:$0xf]
    %v130 = vld [vmem:[%s20 + $0x1b4] sm:$0xf]
    %v131 = vld [vmem:[%s20 + $0x1b8] sm:$0xf]
    %v132 = vld [vmem:[%s20 + $0x1bc] sm:$0xf]
    %v133 = vld [vmem:[%s20 + $0x1c0] sm:$0xf]
    %v134 = vld [vmem:[%s20 + $0x1c4] sm:$0xf]
    %v135 = vld [vmem:[%s20 + $0x1c8] sm:$0xf]
    %v136 = vld [vmem:[%s20 + $0x1cc] sm:$0xf]
    %v137 = vld [vmem:[%s20 + $0x1d0] sm:$0xf]
    %v138 = vld [vmem:[%s20 + $0x1d4] sm:$0xf]
    %v139 = vld [vmem:[%s20 + $0x1d8] sm:$0xf]
    %v140 = vld [vmem:[%s20 + $0x1dc] sm:$0xf]
    %v141 = vld [vmem:[%s20 + $0x1e0] sm:$0xf]
    %v142 = vld [vmem:[%s20 + $0x1e4] sm:$0xf]
    %v143 = vld [vmem:[%s20 + $0x1e8] sm:$0xf]
    %v144 = vld [vmem:[%s20 + $0x1ec] sm:$0xf]
    %v145 = vld [vmem:[%s20 + $0x1f0] sm:$0xf]
    %v146 = vld [vmem:[%s20 + $0x1f4] sm:$0xf]
    %v147 = vld [vmem:[%s20 + $0x1f8] sm:$0xf]
    %v148 = vld [vmem:[%s20 + $0x1fc] sm:$0xf]
    %v149 = vld [vmem:[%s20 + $0x200] sm:$0xf]
    %v150 = vld [vmem:[%s20 + $0x204] sm:$0xf]
    %v151 = vld [vmem:[%s20 + $0x208] sm:$0xf]
    %v152 = vld [vmem:[%s20 + $0x20c] sm:$0xf]
    %v153 = vld [vmem:[%s20 + $0x210] sm:$0xf]
    %v154 = vld [vmem:[%s20 + $0x214] sm:$0xf]
    %v155 = vld [vmem:[%s20 + $0x218] sm:$0xf]
    %v156 = vld [vmem:[%s20 + $0x21c] sm:$0xf]
    %v157 = vld [vmem:[%s20 + $0x220] sm:$0xf]
    %v158 = vld [vmem:[%s20 + $0x224] sm:$0xf]
    %v159 = vld [vmem:[%s20 + $0x228] sm:$0xf]
    %v160 = vld [vmem:[%s20 + $0x22c] sm:$0xf]
    %v161 = vld [vmem:[%s20 + $0x230] sm:$0xf]
    %v162 = vld [vmem:[%s20 + $0x234] sm:$0xf]
    %v163 = vld [vmem:[%s20 + $0x238] sm:$0xf]
    %v164 = vld [vmem:[%s20 + $0x23c] sm:$0xf]
    %v165 = vld [vmem:[%s20 + $0x240] sm:$0xf]
    %v166 = vld [vmem:[%s20 + $0x244] sm:$0xf]
    %v167 = vld [vmem:[%s20 + $0x248] sm:$0xf]
    %v168 = vld [vmem:[%s20 + $0x24c] sm:$0xf]
    %v169 = vld [vmem:[%s20 + $0x250] sm:$0xf]
    %v170 = vld [vmem:[%s20 + $0x254] sm:$0xf]
    %v171 = vld [vmem:[%s20 + $0x258] sm:$0xf]
    %v172 = vld [vmem:[%s20 + $0x25c] sm:$0xf]
    %v173 = vld [vmem:[%s20 + $0x260] sm:$0xf]
    %v174 = vld [vmem:[%s20 + $0x264] sm:$0xf]
    %v175 = vld [vmem:[%s20 + $0x268] sm:$0xf]
    %v176 = vld [vmem:[%s20 + $0x26c] sm:$0xf]
    %v177 = vld [vmem:[%s20 + $0x270] sm:$0xf]
    %v178 = vld [vmem:[%s20 + $0x274] sm:$0xf]
    %v179 = vld [vmem:[%s20 + $0x278] sm:$0xf]
    %v180 = vld [vmem:[%s20 + $0x27c] sm:$0xf]
    %v181 = vld [vmem:[%s20 + $0x280] sm:$0xf]
    %v182 = vld [vmem:[%s20 + $0x284] sm:$0xf]
    %v183 = vld [vmem:[%s20 + $0x288] sm:$0xf]
    %v184 = vld [vmem:[%s20 + $0x28c] sm:$0xf]
    %v185 = vld [vmem:[%s20 + $0x290] sm:$0xf]
    %v186 = vld [vmem:[%s20 + $0x294] sm:$0xf]
    %v187 = vld [vmem:[%s20 + $0x298] sm:$0xf]
    %v188 = vld [vmem:[%s20 + $0x29c] sm:$0xf]
    %v189 = vld [vmem:[%s20 + $0x2a0] sm:$0xf]
    %v190 = vld [vmem:[%s20 + $0x2a4] sm:$0xf]
    %v191 = vld [vmem:[%s20 + $0x2a8] sm:$0xf]
    %v192 = vld [vmem:[%s20 + $0x2ac] sm:$0xf]
    %v193 = vld [vmem:[%s20 + $0x2b0] sm:$0xf]
    %v194 = vld [vmem:[%s20 + $0x2b4] sm:$0xf]
    %v195 = vld [vmem:[%s20 + $0x2b8] sm:$0xf]
    %v196 = vld [vmem:[%s20 + $0x2bc] sm:$0xf]
    %v197 = vld [vmem:[%s20 + $0x2c0] sm:$0xf]
    %v198 = vld [vmem:[%s20 + $0x2c4] sm:$0xf]
    %v199 = vld [vmem:[%s20 + $0x2c8] sm:$0xf]
    %v200 = vld [vmem:[%s20 + $0x2cc] sm:$0xf]
    %v201 = vld [vmem:[%s20 + $0x2d0] sm:$0xf]
    %v202 = vld [vmem:[%s20 + $0x2d4] sm:$0xf]
    %v203 = vld [vmem:[%s20 + $0x2d8] sm:$0xf]
    %v204 = vld [vmem:[%s20 + $0x2dc] sm:$0xf]
    %v205 = vld [vmem:[%s20 + $0x2e0] sm:$0xf]
    %v206 = vld [vmem:[%s20 + $0x2e4] sm:$0xf]
    %v207 = vld [vmem:[%s20 + $0x2e8] sm:$0xf]
    %v208 = vld [vmem:[%s20 + $0x2ec] sm:$0xf]
    %v209 = vld [vmem:[%s20 + $0x2f0] sm:$0xf]
    %v210 = vld [vmem:[%s20 + $0x2f4] sm:$0xf]
    %v211 = vld [vmem:[%s20 + $0x2f8] sm:$0xf]
    %v212 = vld [vmem:[%s20 + $0x2fc] sm:$0xf]
    %v213 = vld [vmem:[%s20 + $0x300] sm:$0xf]
    %v214 = vld [vmem:[%s20 + $0x304] sm:$0xf]
    %v215 = vld [vmem:[%s20 + $0x308] sm:$0xf]
    %v216 = vld [vmem:[%s20 + $0x30c] sm:$0xf]
    %v217 = vld [vmem:[%s20 + $0x310] sm:$0xf]
    %v218 = vld [vmem:[%s20 + $0x314] sm:$0xf]
    %v219 = vld [vmem:[%s20 + $0x318] sm:$0xf]
    %v220 = vld [vmem:[%s20 + $0x31c] sm:$0xf]
    %v221 = vld [vmem:[%s20 + $0x320] sm:$0xf]
    %v222 = vld [vmem:[%s20 + $0x324] sm:$0xf]
    %v223 = vld [vmem:[%s20 + $0x328] sm:$0xf]
    %v224 = vld [vmem:[%s20 + $0x32c] sm:$0xf]
    %v225 = vld [vmem:[%s20 + $0x330] sm:$0xf]
    %v226 = vld [vmem:[%s20 + $0x334] sm:$0xf]
    %v227 = vld [vmem:[%s20 + $0x338] sm:$0xf]
    %v228 = vld [vmem:[%s20 + $0x33c] sm:$0xf]
    %v229 = vld [vmem:[%s20 + $0x340] sm:$0xf]
    %v230 = vld [vmem:[%s20 + $0x344] sm:$0xf]
    %v231 = vld [vmem:[%s20 + $0x348] sm:$0xf]
    %v232 = vld [vmem:[%s20 + $0x34c] sm:$0xf]
    %v233 = vld [vmem:[%s20 + $0x350] sm:$0xf]
    %v234 = vld [vmem:[%s20 + $0x354] sm:$0xf]
    %v235 = vld [vmem:[%s20 + $0x358] sm:$0xf]
    %v236 = vld [vmem:[%s20 + $0x35c] sm:$0xf]
    %v237 = vld [vmem:[%s20 + $0x360] sm:$0xf]
    %v238 = vld [vmem:[%s20 + $0x364] sm:$0xf]
    %v239 = vld [vmem:[%s20 + $0x368] sm:$0xf]
    %v240 = vld [vmem:[%s20 + $0x36c] sm:$0xf]
    %v241 = vld [vmem:[%s20 + $0x370] sm:$0xf]
    %v242 = vld [vmem:[%s20 + $0x374] sm:$0xf]
    %v243 = vld [vmem:[%s20 + $0x378] sm:$0xf]
    %v244 = vld [vmem:[%s20 + $0x37c] sm:$0xf]
    %v245 = vld [vmem:[%s20 + $0x380] sm:$0xf]
    %v246 = vld [vmem:[%s20 + $0x384] sm:$0xf]
    %v247 = vld [vmem:[%s20 + $0x388] sm:$0xf]
    %v248 = vld [vmem:[%s20 + $0x38c] sm:$0xf]
    %v249 = vld [vmem:[%s20 + $0x390] sm:$0xf]
    %v250 = vld [vmem:[%s20 + $0x394] sm:$0xf]
    %v251 = vld [vmem:[%s20 + $0x398] sm:$0xf]
    %v252 = vld [vmem:[%s20 + $0x39c] sm:$0xf]
    %v253 = vld [vmem:[%s20 + $0x3a0] sm:$0xf]
    %v254 = vld [vmem:[%s20 + $0x3a4] sm:$0xf]
    %v255 = vld [vmem:[%s20 + $0x3a8] sm:$0xf]
    %v256 = vld [vmem:[%s20 + $0x3ac] sm:$0xf]
    %v257 = vld [vmem:[%s20 + $0x3b0] sm:$0xf]
    %v258 = vld [vmem:[%s20 + $0x3b4] sm:$0xf]
    %v259 = vld [vmem:[%s20 + $0x3b8] sm:$0xf]
    %v260 = vld [vmem:[%s20 + $0x3bc] sm:$0xf]
    %v261 = vld [vmem:[%s20 + $0x3c0] sm:$0xf]
    %v262 = vld [vmem:[%s20 + $0x3c4] sm:$0xf]
    %v263 = vld [vmem:[%s20 + $0x3c8] sm:$0xf]
    %v264 = vld [vmem:[%s20 + $0x3cc] sm:$0xf]
    %v265 = vld [vmem:[%s20 + $0x3d0] sm:$0xf]
    %v266 = vld [vmem:[%s20 + $0x3d4] sm:$0xf]
    %v267 = vld [vmem:[%s20 + $0x3d8] sm:$0xf]
    %v268 = vld [vmem:[%s20 + $0x3dc] sm:$0xf]
    %v269 = vld [vmem:[%s20 + $0x3e0] sm:$0xf]
    %v270 = vld [vmem:[%s20 + $0x3e4] sm:$0xf]
    %v271 = vld [vmem:[%s20 + $0x3e8] sm:$0xf]
    %v272 = vld [vmem:[%s20 + $0x3ec] sm:$0xf]
    %v273 = vld [vmem:[%s20 + $0x3f0] sm:$0xf]
    %v274 = vld [vmem:[%s20 + $0x3f4] sm:$0xf]
    %v275 = vld [vmem:[%s20 + $0x3f8] sm:$0xf]
    %v276 = vld [vmem:[%s20 + $0x3fc] sm:$0xf]
    %v278 = vlaneseq
    %v279 = vshrl.u32 %v278, 7
    %v280 = vsub.s32 0, %v279
    %v281 = vrot.slane %v17, %v280
    %v539 = vunpack.c.l.b16 %v21
    %v540 = vunpack.c.l.b16 %v22
    %v541 = vunpack.c.l.b16 %v23
    %v542 = vunpack.c.l.b16 %v24
    %v543 = vunpack.c.l.b16 %v25
    %v544 = vunpack.c.l.b16 %v26
    %v545 = vunpack.c.l.b16 %v27
    %v546 = vunpack.c.l.b16 %v28
    %v547 = vunpack.c.l.b16 %v29
    %v548 = vunpack.c.l.b16 %v30
    %v549 = vunpack.c.l.b16 %v31
    %v550 = vunpack.c.l.b16 %v32
    %v551 = vunpack.c.l.b16 %v33
    %v552 = vunpack.c.l.b16 %v34
    %v553 = vunpack.c.l.b16 %v35
    %v554 = vunpack.c.l.b16 %v36
    %v555 = vunpack.c.l.b16 %v37
    %v556 = vunpack.c.l.b16 %v38
    %v557 = vunpack.c.l.b16 %v39
    %v558 = vunpack.c.l.b16 %v40
    %v559 = vunpack.c.l.b16 %v41
    %v560 = vunpack.c.l.b16 %v42
    %v561 = vunpack.c.l.b16 %v43
    %v562 = vunpack.c.l.b16 %v44
    %v563 = vunpack.c.l.b16 %v45
    %v564 = vunpack.c.l.b16 %v46
    %v565 = vunpack.c.l.b16 %v47
    %v566 = vunpack.c.l.b16 %v48
    %v567 = vunpack.c.l.b16 %v49
    %v568 = vunpack.c.l.b16 %v50
    %v569 = vunpack.c.l.b16 %v51
    %v570 = vunpack.c.l.b16 %v52
    %v571 = vunpack.c.l.b16 %v53
    %v572 = vunpack.c.l.b16 %v54
    %v573 = vunpack.c.l.b16 %v55
    %v574 = vunpack.c.l.b16 %v56
    %v575 = vunpack.c.l.b16 %v57
    %v576 = vunpack.c.l.b16 %v58
    %v577 = vunpack.c.l.b16 %v59
    %v578 = vunpack.c.l.b16 %v60
    %v579 = vunpack.c.l.b16 %v61
    %v580 = vunpack.c.l.b16 %v62
    %v581 = vunpack.c.l.b16 %v63
    %v582 = vunpack.c.l.b16 %v64
    %v583 = vunpack.c.l.b16 %v65
    %v584 = vunpack.c.l.b16 %v66
    %v585 = vunpack.c.l.b16 %v67
    %v586 = vunpack.c.l.b16 %v68
    %v587 = vunpack.c.l.b16 %v69
    %v588 = vunpack.c.l.b16 %v70
    %v589 = vunpack.c.l.b16 %v71
    %v590 = vunpack.c.l.b16 %v72
    %v591 = vunpack.c.l.b16 %v73
    %v592 = vunpack.c.l.b16 %v74
    %v593 = vunpack.c.l.b16 %v75
    %v594 = vunpack.c.l.b16 %v76
    %v595 = vunpack.c.l.b16 %v77
    %v596 = vunpack.c.l.b16 %v78
    %v597 = vunpack.c.l.b16 %v79
    %v598 = vunpack.c.l.b16 %v80
    %v599 = vunpack.c.l.b16 %v81
    %v600 = vunpack.c.l.b16 %v82
    %v601 = vunpack.c.l.b16 %v83
    %v602 = vunpack.c.l.b16 %v84
    %v603 = vunpack.c.l.b16 %v85
    %v604 = vunpack.c.l.b16 %v86
    %v605 = vunpack.c.l.b16 %v87
    %v606 = vunpack.c.l.b16 %v88
    %v607 = vunpack.c.l.b16 %v89
    %v608 = vunpack.c.l.b16 %v90
    %v609 = vunpack.c.l.b16 %v91
    %v610 = vunpack.c.l.b16 %v92
    %v611 = vunpack.c.l.b16 %v93
    %v612 = vunpack.c.l.b16 %v94
    %v613 = vunpack.c.l.b16 %v95
    %v614 = vunpack.c.l.b16 %v96
    %v615 = vunpack.c.l.b16 %v97
    %v616 = vunpack.c.l.b16 %v98
    %v617 = vunpack.c.l.b16 %v99
    %v618 = vunpack.c.l.b16 %v100
    %v619 = vunpack.c.l.b16 %v101
    %v620 = vunpack.c.l.b16 %v102
    %v621 = vunpack.c.l.b16 %v103
    %v622 = vunpack.c.l.b16 %v104
    %v623 = vunpack.c.l.b16 %v105
    %v624 = vunpack.c.l.b16 %v106
    %v625 = vunpack.c.l.b16 %v107
    %v626 = vunpack.c.l.b16 %v108
    %v627 = vunpack.c.l.b16 %v109
    %v628 = vunpack.c.l.b16 %v110
    %v629 = vunpack.c.l.b16 %v111
    %v630 = vunpack.c.l.b16 %v112
    %v631 = vunpack.c.l.b16 %v113
    %v632 = vunpack.c.l.b16 %v114
    %v633 = vunpack.c.l.b16 %v115
    %v634 = vunpack.c.l.b16 %v116
    %v635 = vunpack.c.l.b16 %v117
    %v636 = vunpack.c.l.b16 %v118
    %v637 = vunpack.c.l.b16 %v119
    %v638 = vunpack.c.l.b16 %v120
    %v639 = vunpack.c.l.b16 %v121
    %v640 = vunpack.c.l.b16 %v122
    %v641 = vunpack.c.l.b16 %v123
    %v642 = vunpack.c.l.b16 %v124
    %v643 = vunpack.c.l.b16 %v125
    %v644 = vunpack.c.l.b16 %v126
    %v645 = vunpack.c.l.b16 %v127
    %v646 = vunpack.c.l.b16 %v128
    %v647 = vunpack.c.l.b16 %v129
    %v648 = vunpack.c.l.b16 %v130
    %v649 = vunpack.c.l.b16 %v131
    %v650 = vunpack.c.l.b16 %v132
    %v651 = vunpack.c.l.b16 %v133
    %v652 = vunpack.c.l.b16 %v134
    %v653 = vunpack.c.l.b16 %v135
    %v654 = vunpack.c.l.b16 %v136
    %v655 = vunpack.c.l.b16 %v137
    %v656 = vunpack.c.l.b16 %v138
    %v657 = vunpack.c.l.b16 %v139
    %v658 = vunpack.c.l.b16 %v140
    %v659 = vunpack.c.l.b16 %v141
    %v660 = vunpack.c.l.b16 %v142
    %v661 = vunpack.c.l.b16 %v143
    %v662 = vunpack.c.l.b16 %v144
    %v663 = vunpack.c.l.b16 %v145
    %v664 = vunpack.c.l.b16 %v146
    %v665 = vunpack.c.l.b16 %v147
    %v666 = vunpack.c.l.b16 %v148
    %v667 = vunpack.c.l.b16 %v149
    %v668 = vunpack.c.l.b16 %v150
    %v669 = vunpack.c.l.b16 %v151
    %v670 = vunpack.c.l.b16 %v152
    %v671 = vunpack.c.l.b16 %v153
    %v672 = vunpack.c.l.b16 %v154
    %v673 = vunpack.c.l.b16 %v155
    %v674 = vunpack.c.l.b16 %v156
    %v675 = vunpack.c.l.b16 %v157
    %v676 = vunpack.c.l.b16 %v158
    %v677 = vunpack.c.l.b16 %v159
    %v678 = vunpack.c.l.b16 %v160
    %v679 = vunpack.c.l.b16 %v161
    %v680 = vunpack.c.l.b16 %v162
    %v681 = vunpack.c.l.b16 %v163
    %v682 = vunpack.c.l.b16 %v164
    %v683 = vunpack.c.l.b16 %v165
    %v684 = vunpack.c.l.b16 %v166
    %v685 = vunpack.c.l.b16 %v167
    %v686 = vunpack.c.l.b16 %v168
    %v687 = vunpack.c.l.b16 %v169
    %v688 = vunpack.c.l.b16 %v170
    %v689 = vunpack.c.l.b16 %v171
    %v690 = vunpack.c.l.b16 %v172
    %v691 = vunpack.c.l.b16 %v173
    %v692 = vunpack.c.l.b16 %v174
    %v693 = vunpack.c.l.b16 %v175
    %v694 = vunpack.c.l.b16 %v176
    %v695 = vunpack.c.l.b16 %v177
    %v696 = vunpack.c.l.b16 %v178
    %v697 = vunpack.c.l.b16 %v179
    %v698 = vunpack.c.l.b16 %v180
    %v699 = vunpack.c.l.b16 %v181
    %v700 = vunpack.c.l.b16 %v182
    %v701 = vunpack.c.l.b16 %v183
    %v702 = vunpack.c.l.b16 %v184
    %v703 = vunpack.c.l.b16 %v185
    %v704 = vunpack.c.l.b16 %v186
    %v705 = vunpack.c.l.b16 %v187
    %v706 = vunpack.c.l.b16 %v188
    %v707 = vunpack.c.l.b16 %v189
    %v708 = vunpack.c.l.b16 %v190
    %v709 = vunpack.c.l.b16 %v191
    %v710 = vunpack.c.l.b16 %v192
    %v711 = vunpack.c.l.b16 %v193
    %v712 = vunpack.c.l.b16 %v194
    %v713 = vunpack.c.l.b16 %v195
    %v714 = vunpack.c.l.b16 %v196
    %v715 = vunpack.c.l.b16 %v197
    %v716 = vunpack.c.l.b16 %v198
    %v717 = vunpack.c.l.b16 %v199
    %v718 = vunpack.c.l.b16 %v200
    %v719 = vunpack.c.l.b16 %v201
    %v720 = vunpack.c.l.b16 %v202
    %v721 = vunpack.c.l.b16 %v203
    %v722 = vunpack.c.l.b16 %v204
    %v723 = vunpack.c.l.b16 %v205
    %v724 = vunpack.c.l.b16 %v206
    %v725 = vunpack.c.l.b16 %v207
    %v726 = vunpack.c.l.b16 %v208
    %v727 = vunpack.c.l.b16 %v209
    %v728 = vunpack.c.l.b16 %v210
    %v729 = vunpack.c.l.b16 %v211
    %v730 = vunpack.c.l.b16 %v212
    %v731 = vunpack.c.l.b16 %v213
    %v732 = vunpack.c.l.b16 %v214
    %v733 = vunpack.c.l.b16 %v215
    %v734 = vunpack.c.l.b16 %v216
    %v735 = vunpack.c.l.b16 %v217
    %v736 = vunpack.c.l.b16 %v218
    %v737 = vunpack.c.l.b16 %v219
    %v738 = vunpack.c.l.b16 %v220
    %v739 = vunpack.c.l.b16 %v221
    %v740 = vunpack.c.l.b16 %v222
    %v741 = vunpack.c.l.b16 %v223
    %v742 = vunpack.c.l.b16 %v224
    %v743 = vunpack.c.l.b16 %v225
    %v744 = vunpack.c.l.b16 %v226
    %v745 = vunpack.c.l.b16 %v227
    %v746 = vunpack.c.l.b16 %v228
    %v747 = vunpack.c.l.b16 %v229
    %v748 = vunpack.c.l.b16 %v230
    %v749 = vunpack.c.l.b16 %v231
    %v750 = vunpack.c.l.b16 %v232
    %v751 = vunpack.c.l.b16 %v233
    %v752 = vunpack.c.l.b16 %v234
    %v753 = vunpack.c.l.b16 %v235
    %v754 = vunpack.c.l.b16 %v236
    %v755 = vunpack.c.l.b16 %v237
    %v756 = vunpack.c.l.b16 %v238
    %v757 = vunpack.c.l.b16 %v239
    %v758 = vunpack.c.l.b16 %v240
    %v759 = vunpack.c.l.b16 %v241
    %v760 = vunpack.c.l.b16 %v242
    %v761 = vunpack.c.l.b16 %v243
    %v762 = vunpack.c.l.b16 %v244
    %v763 = vunpack.c.l.b16 %v245
    %v764 = vunpack.c.l.b16 %v246
    %v765 = vunpack.c.l.b16 %v247
    %v766 = vunpack.c.l.b16 %v248
    %v767 = vunpack.c.l.b16 %v249
    %v768 = vunpack.c.l.b16 %v250
    %v769 = vunpack.c.l.b16 %v251
    %v770 = vunpack.c.l.b16 %v252
    %v771 = vunpack.c.l.b16 %v253
    %v772 = vunpack.c.l.b16 %v254
    %v773 = vunpack.c.l.b16 %v255
    %v774 = vunpack.c.l.b16 %v256
    %v775 = vunpack.c.l.b16 %v257
    %v776 = vunpack.c.l.b16 %v258
    %v777 = vunpack.c.l.b16 %v259
    %v778 = vunpack.c.l.b16 %v260
    %v779 = vunpack.c.l.b16 %v261
    %v780 = vunpack.c.l.b16 %v262
    %v781 = vunpack.c.l.b16 %v263
    %v782 = vunpack.c.l.b16 %v264
    %v783 = vunpack.c.l.b16 %v265
    %v784 = vunpack.c.l.b16 %v266
    %v785 = vunpack.c.l.b16 %v267
    %v786 = vunpack.c.l.b16 %v268
    %v787 = vunpack.c.l.b16 %v269
    %v788 = vunpack.c.l.b16 %v270
    %v789 = vunpack.c.l.b16 %v271
    %v790 = vunpack.c.l.b16 %v272
    %v791 = vunpack.c.l.b16 %v273
    %v792 = vunpack.c.l.b16 %v274
    %v793 = vunpack.c.l.b16 %v275
    %v794 = vunpack.c.l.b16 %v276
    %v795 = vpack.c.b16 %v540, %v539
    %v796 = vpack.c.b16 %v542, %v541
    %v797 = vpack.c.b16 %v544, %v543
    %v798 = vpack.c.b16 %v546, %v545
    %v799 = vpack.c.b16 %v548, %v547
    %v800 = vpack.c.b16 %v550, %v549
    %v801 = vpack.c.b16 %v552, %v551
    %v802 = vpack.c.b16 %v554, %v553
    %v803 = vpack.c.b16 %v556, %v555
    %v804 = vpack.c.b16 %v558, %v557
    %v805 = vpack.c.b16 %v560, %v559
    %v806 = vpack.c.b16 %v562, %v561
    %v807 = vpack.c.b16 %v564, %v563
    %v808 = vpack.c.b16 %v566, %v565
    %v809 = vpack.c.b16 %v568, %v567
    %v810 = vpack.c.b16 %v570, %v569
    %v811 = vpack.c.b16 %v572, %v571
    %v812 = vpack.c.b16 %v574, %v573
    %v813 = vpack.c.b16 %v576, %v575
    %v814 = vpack.c.b16 %v578, %v577
    %v815 = vpack.c.b16 %v580, %v579
    %v816 = vpack.c.b16 %v582, %v581
    %v817 = vpack.c.b16 %v584, %v583
    %v818 = vpack.c.b16 %v586, %v585
    %v819 = vpack.c.b16 %v588, %v587
    %v820 = vpack.c.b16 %v590, %v589
    %v821 = vpack.c.b16 %v592, %v591
    %v822 = vpack.c.b16 %v594, %v593
    %v823 = vpack.c.b16 %v596, %v595
    %v824 = vpack.c.b16 %v598, %v597
    %v825 = vpack.c.b16 %v600, %v599
    %v826 = vpack.c.b16 %v602, %v601
    %v827 = vpack.c.b16 %v604, %v603
    %v828 = vpack.c.b16 %v606, %v605
    %v829 = vpack.c.b16 %v608, %v607
    %v830 = vpack.c.b16 %v610, %v609
    %v831 = vpack.c.b16 %v612, %v611
    %v832 = vpack.c.b16 %v614, %v613
    %v833 = vpack.c.b16 %v616, %v615
    %v834 = vpack.c.b16 %v618, %v617
    %v835 = vpack.c.b16 %v620, %v619
    %v836 = vpack.c.b16 %v622, %v621
    %v837 = vpack.c.b16 %v624, %v623
    %v838 = vpack.c.b16 %v626, %v625
    %v839 = vpack.c.b16 %v628, %v627
    %v840 = vpack.c.b16 %v630, %v629
    %v841 = vpack.c.b16 %v632, %v631
    %v842 = vpack.c.b16 %v634, %v633
    %v843 = vpack.c.b16 %v636, %v635
    %v844 = vpack.c.b16 %v638, %v637
    %v845 = vpack.c.b16 %v640, %v639
    %v846 = vpack.c.b16 %v642, %v641
    %v847 = vpack.c.b16 %v644, %v643
    %v848 = vpack.c.b16 %v646, %v645
    %v849 = vpack.c.b16 %v648, %v647
    %v850 = vpack.c.b16 %v650, %v649
    %v851 = vpack.c.b16 %v652, %v651
    %v852 = vpack.c.b16 %v654, %v653
    %v853 = vpack.c.b16 %v656, %v655
    %v854 = vpack.c.b16 %v658, %v657
    %v855 = vpack.c.b16 %v660, %v659
    %v856 = vpack.c.b16 %v662, %v661
    %v857 = vpack.c.b16 %v664, %v663
    %v858 = vpack.c.b16 %v666, %v665
    %v859 = vpack.c.b16 %v668, %v667
    %v860 = vpack.c.b16 %v670, %v669
    %v861 = vpack.c.b16 %v672, %v671
    %v862 = vpack.c.b16 %v674, %v673
    %v863 = vpack.c.b16 %v676, %v675
    %v864 = vpack.c.b16 %v678, %v677
    %v865 = vpack.c.b16 %v680, %v679
    %v866 = vpack.c.b16 %v682, %v681
    %v867 = vpack.c.b16 %v684, %v683
    %v868 = vpack.c.b16 %v686, %v685
    %v869 = vpack.c.b16 %v688, %v687
    %v870 = vpack.c.b16 %v690, %v689
    %v871 = vpack.c.b16 %v692, %v691
    %v872 = vpack.c.b16 %v694, %v693
    %v873 = vpack.c.b16 %v696, %v695
    %v874 = vpack.c.b16 %v698, %v697
    %v875 = vpack.c.b16 %v700, %v699
    %v876 = vpack.c.b16 %v702, %v701
    %v877 = vpack.c.b16 %v704, %v703
    %v878 = vpack.c.b16 %v706, %v705
    %v879 = vpack.c.b16 %v708, %v707
    %v880 = vpack.c.b16 %v710, %v709
    %v881 = vpack.c.b16 %v712, %v711
    %v882 = vpack.c.b16 %v714, %v713
    %v883 = vpack.c.b16 %v716, %v715
    %v884 = vpack.c.b16 %v718, %v717
    %v885 = vpack.c.b16 %v720, %v719
    %v886 = vpack.c.b16 %v722, %v721
    %v887 = vpack.c.b16 %v724, %v723
    %v888 = vpack.c.b16 %v726, %v725
    %v889 = vpack.c.b16 %v728, %v727
    %v890 = vpack.c.b16 %v730, %v729
    %v891 = vpack.c.b16 %v732, %v731
    %v892 = vpack.c.b16 %v734, %v733
    %v893 = vpack.c.b16 %v736, %v735
    %v894 = vpack.c.b16 %v738, %v737
    %v895 = vpack.c.b16 %v740, %v739
    %v896 = vpack.c.b16 %v742, %v741
    %v897 = vpack.c.b16 %v744, %v743
    %v898 = vpack.c.b16 %v746, %v745
    %v899 = vpack.c.b16 %v748, %v747
    %v900 = vpack.c.b16 %v750, %v749
    %v901 = vpack.c.b16 %v752, %v751
    %v902 = vpack.c.b16 %v754, %v753
    %v903 = vpack.c.b16 %v756, %v755
    %v904 = vpack.c.b16 %v758, %v757
    %v905 = vpack.c.b16 %v760, %v759
    %v906 = vpack.c.b16 %v762, %v761
    %v907 = vpack.c.b16 %v764, %v763
    %v908 = vpack.c.b16 %v766, %v765
    %v909 = vpack.c.b16 %v768, %v767
    %v910 = vpack.c.b16 %v770, %v769
    %v911 = vpack.c.b16 %v772, %v771
    %v912 = vpack.c.b16 %v774, %v773
    %v913 = vpack.c.b16 %v776, %v775
    %v914 = vpack.c.b16 %v778, %v777
    %v915 = vpack.c.b16 %v780, %v779
    %v916 = vpack.c.b16 %v782, %v781
    %v917 = vpack.c.b16 %v784, %v783
    %v918 = vpack.c.b16 %v786, %v785
    %v919 = vpack.c.b16 %v788, %v787
    %v920 = vpack.c.b16 %v790, %v789
    %v921 = vpack.c.b16 %v792, %v791
    %v922 = vpack.c.b16 %v794, %v793
    %vm923 = vcmask 23552
    %v925 = vsel %vm923, %v795, 0
    %v928 = vsel %vm923, %v796, 0
    %v931 = vsel %vm923, %v797, 0
    %v934 = vsel %vm923, %v798, 0
    %v937 = vsel %vm923, %v799, 0
    %v940 = vsel %vm923, %v800, 0
    %v943 = vsel %vm923, %v801, 0
    %v946 = vsel %vm923, %v802, 0
    %v949 = vsel %vm923, %v803, 0
    %v952 = vsel %vm923, %v804, 0
    %v955 = vsel %vm923, %v805, 0
    %v958 = vsel %vm923, %v806, 0
    %v961 = vsel %vm923, %v807, 0
    %v964 = vsel %vm923, %v808, 0
    %v967 = vsel %vm923, %v809, 0
    %v970 = vsel %vm923, %v810, 0
    %v973 = vsel %vm923, %v811, 0
    %v976 = vsel %vm923, %v812, 0
    %v979 = vsel %vm923, %v813, 0
    %v982 = vsel %vm923, %v814, 0
    %v985 = vsel %vm923, %v815, 0
    %v988 = vsel %vm923, %v816, 0
    %v991 = vsel %vm923, %v817, 0
    %v994 = vsel %vm923, %v818, 0
    %v997 = vsel %vm923, %v819, 0
    %v1000 = vsel %vm923, %v820, 0
    %v1003 = vsel %vm923, %v821, 0
    %v1006 = vsel %vm923, %v822, 0
    %v1009 = vsel %vm923, %v823, 0
    %v1012 = vsel %vm923, %v824, 0
    %v1015 = vsel %vm923, %v825, 0
    %v1018 = vsel %vm923, %v826, 0
    %v1021 = vsel %vm923, %v827, 0
    %v1024 = vsel %vm923, %v828, 0
    %v1027 = vsel %vm923, %v829, 0
    %v1030 = vsel %vm923, %v830, 0
    %v1033 = vsel %vm923, %v831, 0
    %v1036 = vsel %vm923, %v832, 0
    %v1039 = vsel %vm923, %v833, 0
    %v1042 = vsel %vm923, %v834, 0
    %v1045 = vsel %vm923, %v835, 0
    %v1048 = vsel %vm923, %v836, 0
    %v1051 = vsel %vm923, %v837, 0
    %v1054 = vsel %vm923, %v838, 0
    %v1057 = vsel %vm923, %v839, 0
    %v1060 = vsel %vm923, %v840, 0
    %v1063 = vsel %vm923, %v841, 0
    %v1066 = vsel %vm923, %v842, 0
    %v1069 = vsel %vm923, %v843, 0
    %v1072 = vsel %vm923, %v844, 0
    %v1075 = vsel %vm923, %v845, 0
    %v1078 = vsel %vm923, %v846, 0
    %v1081 = vsel %vm923, %v847, 0
    %v1084 = vsel %vm923, %v848, 0
    %v1087 = vsel %vm923, %v849, 0
    %v1090 = vsel %vm923, %v850, 0
    %v1093 = vsel %vm923, %v851, 0
    %v1096 = vsel %vm923, %v852, 0
    %v1099 = vsel %vm923, %v853, 0
    %v1102 = vsel %vm923, %v854, 0
    %v1105 = vsel %vm923, %v855, 0
    %v1108 = vsel %vm923, %v856, 0
    %v1111 = vsel %vm923, %v857, 0
    %v1114 = vsel %vm923, %v858, 0
    %v1117 = vsel %vm923, %v859, 0
    %v1120 = vsel %vm923, %v860, 0
    %v1123 = vsel %vm923, %v861, 0
    %v1126 = vsel %vm923, %v862, 0
    %v1129 = vsel %vm923, %v863, 0
    %v1132 = vsel %vm923, %v864, 0
    %v1135 = vsel %vm923, %v865, 0
    %v1138 = vsel %vm923, %v866, 0
    %v1141 = vsel %vm923, %v867, 0
    %v1144 = vsel %vm923, %v868, 0
    %v1147 = vsel %vm923, %v869, 0
    %v1150 = vsel %vm923, %v870, 0
    %v1153 = vsel %vm923, %v871, 0
    %v1156 = vsel %vm923, %v872, 0
    %v1159 = vsel %vm923, %v873, 0
    %v1162 = vsel %vm923, %v874, 0
    %v1165 = vsel %vm923, %v875, 0
    %v1168 = vsel %vm923, %v876, 0
    %v1171 = vsel %vm923, %v877, 0
    %v1174 = vsel %vm923, %v878, 0
    %v1177 = vsel %vm923, %v879, 0
    %v1180 = vsel %vm923, %v880, 0
    %v1183 = vsel %vm923, %v881, 0
    %v1186 = vsel %vm923, %v882, 0
    %v1189 = vsel %vm923, %v883, 0
    %v1192 = vsel %vm923, %v884, 0
    %v1195 = vsel %vm923, %v885, 0
    %v1198 = vsel %vm923, %v886, 0
    %v1201 = vsel %vm923, %v887, 0
    %v1204 = vsel %vm923, %v888, 0
    %v1207 = vsel %vm923, %v889, 0
    %v1210 = vsel %vm923, %v890, 0
    %v1213 = vsel %vm923, %v891, 0
    %v1216 = vsel %vm923, %v892, 0
    %v1219 = vsel %vm923, %v893, 0
    %v1222 = vsel %vm923, %v894, 0
    %v1225 = vsel %vm923, %v895, 0
    %v1228 = vsel %vm923, %v896, 0
    %v1231 = vsel %vm923, %v897, 0
    %v1234 = vsel %vm923, %v898, 0
    %v1237 = vsel %vm923, %v899, 0
    %v1240 = vsel %vm923, %v900, 0
    %v1243 = vsel %vm923, %v901, 0
    %v1246 = vsel %vm923, %v902, 0
    %v1249 = vsel %vm923, %v903, 0
    %v1252 = vsel %vm923, %v904, 0
    %v1255 = vsel %vm923, %v905, 0
    %v1258 = vsel %vm923, %v906, 0
    %v1261 = vsel %vm923, %v907, 0
    %v1264 = vsel %vm923, %v908, 0
    %v1267 = vsel %vm923, %v909, 0
    %v1270 = vsel %vm923, %v910, 0
    %v1273 = vsel %vm923, %v911, 0
    %v1276 = vsel %vm923, %v912, 0
    %v1279 = vsel %vm923, %v913, 0
    %v1282 = vsel %vm923, %v914, 0
    %v1285 = vsel %vm923, %v915, 0
    %v1288 = vsel %vm923, %v916, 0
    %v1291 = vsel %vm923, %v917, 0
    %v1294 = vsel %vm923, %v918, 0
    %v1297 = vsel %vm923, %v919, 0
    %v1300 = vsel %vm923, %v920, 0
    %v1303 = vsel %vm923, %v921, 0
    %v1306 = vsel %vm923, %v922, 0
    %vm1308 = vcmask 1040384
    %vm1309 = vcmask 1041408
    %v1310 = vsel %vm1308, 4294967295, 65535
    %v1311 = vsel %vm1309, %v1310, 0
    %v1313 = vand.u32 %v16, %v1311
    %1315 = vmatprep.subr.bf16.mxu0 0
    %1316 = vmatpush1.bf16.msra.mxu0 %v1313
    %1317 = vmatprep.subr.bf16.mxu0 0
    %1318 = vmatpush1.bf16.msra.mxu0 0
    %1319 = vmatprep.subr.bf16.mxu0 0
    %1320 = vmatpush1.bf16.msra.mxu0 0
    %1321 = vmatprep.subr.bf16.mxu0 0
    %1322 = vmatpush1.bf16.msra.mxu0 0
    %1323 = vmatprep.subr.bf16.mxu0 0
    %1324 = vmatpush1.bf16.msra.mxu0 0
    %1325 = vmatprep.subr.bf16.mxu0 0
    %1326 = vmatpush1.bf16.msra.mxu0 0
    %1327 = vmatprep.subr.bf16.mxu0 0
    %1328 = vmatpush1.bf16.msra.mxu0 0
    %1329 = vmatprep.subr.bf16.mxu0 0
    %1330 = vmatpush1.bf16.msra.mxu0 0
    %1331 = vmatprep.subr.bf16.mxu0 0
    %1332 = vmatpush1.bf16.msra.mxu0 0
    %1333 = vmatprep.subr.bf16.mxu0 0
    %1334 = vmatpush1.bf16.msra.mxu0 0
    %1335 = vmatprep.subr.bf16.mxu0 0
    %1336 = vmatpush1.bf16.msra.mxu0 0
    %1337 = vmatprep.subr.bf16.mxu0 0
    %1338 = vmatpush1.bf16.msra.mxu0 0
    %1339 = vmatprep.subr.bf16.mxu0 0
    %1340 = vmatpush1.bf16.msra.mxu0 0
    %1341 = vmatprep.subr.bf16.mxu0 0
    %1342 = vmatpush1.bf16.msra.mxu0 0
    %1343 = vmatprep.subr.bf16.mxu0 0
    %1344 = vmatpush1.bf16.msra.mxu0 0
    %1345 = vmatprep.subr.bf16.mxu0 0
    %1346 = vmatpush1.bf16.msra.mxu0 0
    %1347 = vmatprep.mubr.bf16.mxu0 0
    %1348 = vmatmul.mubr.bf16.gmra.mrb[0].mxu0 %v925
    %v1349 = vpop.f32.mrb[0].mxu0
    %v1350 = vadd.f32 %v281, %v1349
    %v1351 = vpop.f32.mrb[0].mxu0
    %v1352 = vpop.f32.mrb[0].mxu0
    %v1353 = vadd.f32 %v281, %v1352
    %v1354 = vpop.f32.mrb[0].mxu0
    %1355 = vmatprep.mubr.bf16.mxu0 0
    %1356 = vmatmul.mubr.bf16.gmra.mrb[0].mxu0 %v928
    %v1357 = vpop.f32.mrb[0].mxu0
    %v1358 = vadd.f32 %v281, %v1357
    %v1359 = vpop.f32.mrb[0].mxu0
    %v1360 = vpop.f32.mrb[0].mxu0
    %v1361 = vadd.f32 %v281, %v1360
    %v1362 = vpop.f32.mrb[0].mxu0
    %1363 = vmatprep.mubr.bf16.mxu0 0
    %1364 = vmatmul.mubr.bf16.gmra.mrb[0].mxu0 %v931
    %v1365 = vpop.f32.mrb[0].mxu0
    %v1366 = vadd.f32 %v281, %v1365
    %v1367 = vpop.f32.mrb[0].mxu0
    %v1368 = vpop.f32.mrb[0].mxu0
    %v1369 = vadd.f32 %v281, %v1368
    %v1370 = vpop.f32.mrb[0].mxu0
    %1371 = vmatprep.mubr.bf16.mxu0 0
    %1372 = vmatmul.mubr.bf16.gmra.mrb[0].mxu0 %v934
    %v1373 = vpop.f32.mrb[0].mxu0
    %v1374 = vadd.f32 %v281, %v1373
    %v1375 = vpop.f32.mrb[0].mxu0
    %v1376 = vpop.f32.mrb[0].mxu0
    %v1377 = vadd.f32 %v281, %v1376
    %v1378 = vpop.f32.mrb[0].mxu0
    %1379 = vmatprep.mubr.bf16.mxu0 0
    %1380 = vmatmul.mubr.bf16.gmra.mrb[0].mxu0 %v937
    %v1381 = vpop.f32.mrb[0].mxu0
    %v1382 = vadd.f32 %v281, %v1381
    %v1383 = vpop.f32.mrb[0].mxu0
    %v1384 = vpop.f32.mrb[0].mxu0
    %v1385 = vadd.f32 %v281, %v1384
    %v1386 = vpop.f32.mrb[0].mxu0
    %1387 = vmatprep.mubr.bf16.mxu0 0
    %1388 = vmatmul.mubr.bf16.gmra.mrb[0].mxu0 %v940
    %v1389 = vpop.f32.mrb[0].mxu0
    %v1390 = vadd.f32 %v281, %v1389
    %v1391 = vpop.f32.mrb[0].mxu0
    %v1392 = vpop.f32.mrb[0].mxu0
    %v1393 = vadd.f32 %v281, %v1392
    %v1394 = vpop.f32.mrb[0].mxu0
    %1395 = vmatprep.mubr.bf16.mxu0 0
    %1396 = vmatmul.mubr.bf16.gmra.mrb[0].mxu0 %v943
    %v1397 = vpop.f32.mrb[0].mxu0
    %v1398 = vadd.f32 %v281, %v1397
    %v1399 = vpop.f32.mrb[0].mxu0
    %v1400 = vpop.f32.mrb[0].mxu0
    %v1401 = vadd.f32 %v281, %v1400
    %v1402 = vpop.f32.mrb[0].mxu0
    %1403 = vmatprep.mubr.bf16.mxu0 0
    %1404 = vmatmul.mubr.bf16.gmra.mrb[0].mxu0 %v946
    %v1405 = vpop.f32.mrb[0].mxu0
    %v1406 = vadd.f32 %v281, %v1405
    %v1407 = vpop.f32.mrb[0].mxu0
    %v1408 = vpop.f32.mrb[0].mxu0
    %v1409 = vadd.f32 %v281, %v1408
    %v1410 = vpop.f32.mrb[0].mxu0
    %1411 = vmatprep.mubr.bf16.mxu0 0
    %1412 = vmatmul.mubr.bf16.gmra.mrb[0].mxu0 %v949
    %v1413 = vpop.f32.mrb[0].mxu0
    %v1414 = vadd.f32 %v281, %v1413
    %v1415 = vpop.f32.mrb[0].mxu0
    %v1416 = vpop.f32.mrb[0].mxu0
    %v1417 = vadd.f32 %v281, %v1416
    %v1418 = vpop.f32.mrb[0].mxu0
    %1419 = vmatprep.mubr.bf16.mxu0 0
    %1420 = vmatmul.mubr.bf16.gmra.mrb[0].mxu0 %v952
    %v1421 = vpop.f32.mrb[0].mxu0
    %v1422 = vadd.f32 %v281, %v1421
    %v1423 = vpop.f32.mrb[0].mxu0
    %v1424 = vpop.f32.mrb[0].mxu0
    %v1425 = vadd.f32 %v281, %v1424
    %v1426 = vpop.f32.mrb[0].mxu0
    %1427 = vmatprep.mubr.bf16.mxu0 0
    %1428 = vmatmul.mubr.bf16.gmra.mrb[0].mxu0 %v955
    %v1429 = vpop.f32.mrb[0].mxu0
    %v1430 = vadd.f32 %v281, %v1429
    %v1431 = vpop.f32.mrb[0].mxu0
    %v1432 = vpop.f32.mrb[0].mxu0
    %v1433 = vadd.f32 %v281, %v1432
    %v1434 = vpop.f32.mrb[0].mxu0
    %1435 = vmatprep.mubr.bf16.mxu0 0
    %1436 = vmatmul.mubr.bf16.gmra.mrb[0].mxu0 %v958
    %v1437 = vpop.f32.mrb[0].mxu0
    %v1438 = vadd.f32 %v281, %v1437
    %v1439 = vpop.f32.mrb[0].mxu0
    %v1440 = vpop.f32.mrb[0].mxu0
    %v1441 = vadd.f32 %v281, %v1440
    %v1442 = vpop.f32.mrb[0].mxu0
    %1443 = vmatprep.mubr.bf16.mxu0 0
    %1444 = vmatmul.mubr.bf16.gmra.mrb[0].mxu0 %v961
    %v1445 = vpop.f32.mrb[0].mxu0
    %v1446 = vadd.f32 %v281, %v1445
    %v1447 = vpop.f32.mrb[0].mxu0
    %v1448 = vpop.f32.mrb[0].mxu0
    %v1449 = vadd.f32 %v281, %v1448
    %v1450 = vpop.f32.mrb[0].mxu0
    %1451 = vmatprep.mubr.bf16.mxu0 0
    %1452 = vmatmul.mubr.bf16.gmra.mrb[0].mxu0 %v964
    %v1453 = vpop.f32.mrb[0].mxu0
    %v1454 = vadd.f32 %v281, %v1453
    %v1455 = vpop.f32.mrb[0].mxu0
    %v1456 = vpop.f32.mrb[0].mxu0
    %v1457 = vadd.f32 %v281, %v1456
    %v1458 = vpop.f32.mrb[0].mxu0
    %1459 = vmatprep.mubr.bf16.mxu0 0
    %1460 = vmatmul.mubr.bf16.gmra.mrb[0].mxu0 %v967
    %v1461 = vpop.f32.mrb[0].mxu0
    %v1462 = vadd.f32 %v281, %v1461
    %v1463 = vpop.f32.mrb[0].mxu0
    %v1464 = vpop.f32.mrb[0].mxu0
    %v1465 = vadd.f32 %v281, %v1464
    %v1466 = vpop.f32.mrb[0].mxu0
    %1467 = vmatprep.mubr.bf16.mxu0 0
    %1468 = vmatmul.mubr.bf16.gmra.mrb[0].mxu0 %v970
    %v1469 = vpop.f32.mrb[0].mxu0
    %v1470 = vadd.f32 %v281, %v1469
    %v1471 = vpop.f32.mrb[0].mxu0
    %v1472 = vpop.f32.mrb[0].mxu0
    %v1473 = vadd.f32 %v281, %v1472
    %v1474 = vpop.f32.mrb[0].mxu0
    %1475 = vmatprep.mubr.bf16.mxu0 0
    %1476 = vmatmul.mubr.bf16.gmra.mrb[0].mxu0 %v973
    %v1477 = vpop.f32.mrb[0].mxu0
    %v1478 = vadd.f32 %v281, %v1477
    %v1479 = vpop.f32.mrb[0].mxu0
    %v1480 = vpop.f32.mrb[0].mxu0
    %v1481 = vadd.f32 %v281, %v1480
    %v1482 = vpop.f32.mrb[0].mxu0
    %1483 = vmatprep.mubr.bf16.mxu0 0
    %1484 = vmatmul.mubr.bf16.gmra.mrb[0].mxu0 %v976
    %v1485 = vpop.f32.mrb[0].mxu0
    %v1486 = vadd.f32 %v281, %v1485
    %v1487 = vpop.f32.mrb[0].mxu0
    %v1488 = vpop.f32.mrb[0].mxu0
    %v1489 = vadd.f32 %v281, %v1488
    %v1490 = vpop.f32.mrb[0].mxu0
    %1491 = vmatprep.mubr.bf16.mxu0 0
    %1492 = vmatmul.mubr.bf16.gmra.mrb[0].mxu0 %v979
    %v1493 = vpop.f32.mrb[0].mxu0
    %v1494 = vadd.f32 %v281, %v1493
    %v1495 = vpop.f32.mrb[0].mxu0
    %v1496 = vpop.f32.mrb[0].mxu0
    %v1497 = vadd.f32 %v281, %v1496
    %v1498 = vpop.f32.mrb[0].mxu0
    %1499 = vmatprep.mubr.bf16.mxu0 0
    %1500 = vmatmul.mubr.bf16.gmra.mrb[0].mxu0 %v982
    %v1501 = vpop.f32.mrb[0].mxu0
    %v1502 = vadd.f32 %v281, %v1501
    %v1503 = vpop.f32.mrb[0].mxu0
    %v1504 = vpop.f32.mrb[0].mxu0
    %v1505 = vadd.f32 %v281, %v1504
    %v1506 = vpop.f32.mrb[0].mxu0
    %1507 = vmatprep.mubr.bf16.mxu0 0
    %1508 = vmatmul.mubr.bf16.gmra.mrb[0].mxu0 %v985
    %v1509 = vpop.f32.mrb[0].mxu0
    %v1510 = vadd.f32 %v281, %v1509
    %v1511 = vpop.f32.mrb[0].mxu0
    %v1512 = vpop.f32.mrb[0].mxu0
    %v1513 = vadd.f32 %v281, %v1512
    %v1514 = vpop.f32.mrb[0].mxu0
    %1515 = vmatprep.mubr.bf16.mxu0 0
    %1516 = vmatmul.mubr.bf16.gmra.mrb[0].mxu0 %v988
    %v1517 = vpop.f32.mrb[0].mxu0
    %v1518 = vadd.f32 %v281, %v1517
    %v1519 = vpop.f32.mrb[0].mxu0
    %v1520 = vpop.f32.mrb[0].mxu0
    %v1521 = vadd.f32 %v281, %v1520
    %v1522 = vpop.f32.mrb[0].mxu0
    %1523 = vmatprep.mubr.bf16.mxu0 0
    %1524 = vmatmul.mubr.bf16.gmra.mrb[0].mxu0 %v991
    %v1525 = vpop.f32.mrb[0].mxu0
    %v1526 = vadd.f32 %v281, %v1525
    %v1527 = vpop.f32.mrb[0].mxu0
    %v1528 = vpop.f32.mrb[0].mxu0
    %v1529 = vadd.f32 %v281, %v1528
    %v1530 = vpop.f32.mrb[0].mxu0
    %1531 = vmatprep.mubr.bf16.mxu0 0
    %1532 = vmatmul.mubr.bf16.gmra.mrb[0].mxu0 %v994
    %v1533 = vpop.f32.mrb[0].mxu0
    %v1534 = vadd.f32 %v281, %v1533
    %v1535 = vpop.f32.mrb[0].mxu0
    %v1536 = vpop.f32.mrb[0].mxu0
    %v1537 = vadd.f32 %v281, %v1536
    %v1538 = vpop.f32.mrb[0].mxu0
    %1539 = vmatprep.mubr.bf16.mxu0 0
    %1540 = vmatmul.mubr.bf16.gmra.mrb[0].mxu0 %v997
    %v1541 = vpop.f32.mrb[0].mxu0
    %v1542 = vadd.f32 %v281, %v1541
    %v1543 = vpop.f32.mrb[0].mxu0
    %v1544 = vpop.f32.mrb[0].mxu0
    %v1545 = vadd.f32 %v281, %v1544
    %v1546 = vpop.f32.mrb[0].mxu0
    %1547 = vmatprep.mubr.bf16.mxu0 0
    %1548 = vmatmul.mubr.bf16.gmra.mrb[0].mxu0 %v1000
    %v1549 = vpop.f32.mrb[0].mxu0
    %v1550 = vadd.f32 %v281, %v1549
    %v1551 = vpop.f32.mrb[0].mxu0
    %v1552 = vpop.f32.mrb[0].mxu0
    %v1553 = vadd.f32 %v281, %v1552
    %v1554 = vpop.f32.mrb[0].mxu0
    %1555 = vmatprep.mubr.bf16.mxu0 0
    %1556 = vmatmul.mubr.bf16.gmra.mrb[0].mxu0 %v1003
    %v1557 = vpop.f32.mrb[0].mxu0
    %v1558 = vadd.f32 %v281, %v1557
    %v1559 = vpop.f32.mrb[0].mxu0
    %v1560 = vpop.f32.mrb[0].mxu0
    %v1561 = vadd.f32 %v281, %v1560
    %v1562 = vpop.f32.mrb[0].mxu0
    %1563 = vmatprep.mubr.bf16.mxu0 0
    %1564 = vmatmul.mubr.bf16.gmra.mrb[0].mxu0 %v1006
    %v1565 = vpop.f32.mrb[0].mxu0
    %v1566 = vadd.f32 %v281, %v1565
    %v1567 = vpop.f32.mrb[0].mxu0
    %v1568 = vpop.f32.mrb[0].mxu0
    %v1569 = vadd.f32 %v281, %v1568
    %v1570 = vpop.f32.mrb[0].mxu0
    %1571 = vmatprep.mubr.bf16.mxu0 0
    %1572 = vmatmul.mubr.bf16.gmra.mrb[0].mxu0 %v1009
    %v1573 = vpop.f32.mrb[0].mxu0
    %v1574 = vadd.f32 %v281, %v1573
    %v1575 = vpop.f32.mrb[0].mxu0
    %v1576 = vpop.f32.mrb[0].mxu0
    %v1577 = vadd.f32 %v281, %v1576
    %v1578 = vpop.f32.mrb[0].mxu0
    %1579 = vmatprep.mubr.bf16.mxu0 0
    %1580 = vmatmul.mubr.bf16.gmra.mrb[0].mxu0 %v1012
    %v1581 = vpop.f32.mrb[0].mxu0
    %v1582 = vadd.f32 %v281, %v1581
    %v1583 = vpop.f32.mrb[0].mxu0
    %v1584 = vpop.f32.mrb[0].mxu0
    %v1585 = vadd.f32 %v281, %v1584
    %v1586 = vpop.f32.mrb[0].mxu0
    %1587 = vmatprep.mubr.bf16.mxu0 0
    %1588 = vmatmul.mubr.bf16.gmra.mrb[0].mxu0 %v1015
    %v1589 = vpop.f32.mrb[0].mxu0
    %v1590 = vadd.f32 %v281, %v1589
    %v1591 = vpop.f32.mrb[0].mxu0
    %v1592 = vpop.f32.mrb[0].mxu0
    %v1593 = vadd.f32 %v281, %v1592
    %v1594 = vpop.f32.mrb[0].mxu0
    %1595 = vmatprep.mubr.bf16.mxu0 0
    %1596 = vmatmul.mubr.bf16.gmra.mrb[0].mxu0 %v1018
    %v1597 = vpop.f32.mrb[0].mxu0
    %v1598 = vadd.f32 %v281, %v1597
    %v1599 = vpop.f32.mrb[0].mxu0
    %v1600 = vpop.f32.mrb[0].mxu0
    %v1601 = vadd.f32 %v281, %v1600
    %v1602 = vpop.f32.mrb[0].mxu0
    %1603 = vmatprep.mubr.bf16.mxu0 0
    %1604 = vmatmul.mubr.bf16.gmra.mrb[0].mxu0 %v1021
    %v1605 = vpop.f32.mrb[0].mxu0
    %v1606 = vadd.f32 %v281, %v1605
    %v1607 = vpop.f32.mrb[0].mxu0
    %v1608 = vpop.f32.mrb[0].mxu0
    %v1609 = vadd.f32 %v281, %v1608
    %v1610 = vpop.f32.mrb[0].mxu0
    %1611 = vmatprep.mubr.bf16.mxu0 0
    %1612 = vmatmul.mubr.bf16.gmra.mrb[0].mxu0 %v1024
    %v1613 = vpop.f32.mrb[0].mxu0
    %v1614 = vadd.f32 %v281, %v1613
    %v1615 = vpop.f32.mrb[0].mxu0
    %v1616 = vpop.f32.mrb[0].mxu0
    %v1617 = vadd.f32 %v281, %v1616
    %v1618 = vpop.f32.mrb[0].mxu0
    %1619 = vmatprep.mubr.bf16.mxu0 0
    %1620 = vmatmul.mubr.bf16.gmra.mrb[0].mxu0 %v1027
    %v1621 = vpop.f32.mrb[0].mxu0
    %v1622 = vadd.f32 %v281, %v1621
    %v1623 = vpop.f32.mrb[0].mxu0
    %v1624 = vpop.f32.mrb[0].mxu0
    %v1625 = vadd.f32 %v281, %v1624
    %v1626 = vpop.f32.mrb[0].mxu0
    %1627 = vmatprep.mubr.bf16.mxu0 0
    %1628 = vmatmul.mubr.bf16.gmra.mrb[0].mxu0 %v1030
    %v1629 = vpop.f32.mrb[0].mxu0
    %v1630 = vadd.f32 %v281, %v1629
    %v1631 = vpop.f32.mrb[0].mxu0
    %v1632 = vpop.f32.mrb[0].mxu0
    %v1633 = vadd.f32 %v281, %v1632
    %v1634 = vpop.f32.mrb[0].mxu0
    %1635 = vmatprep.mubr.bf16.mxu0 0
    %1636 = vmatmul.mubr.bf16.gmra.mrb[0].mxu0 %v1033
    %v1637 = vpop.f32.mrb[0].mxu0
    %v1638 = vadd.f32 %v281, %v1637
    %v1639 = vpop.f32.mrb[0].mxu0
    %v1640 = vpop.f32.mrb[0].mxu0
    %v1641 = vadd.f32 %v281, %v1640
    %v1642 = vpop.f32.mrb[0].mxu0
    %1643 = vmatprep.mubr.bf16.mxu0 0
    %1644 = vmatmul.mubr.bf16.gmra.mrb[0].mxu0 %v1036
    %v1645 = vpop.f32.mrb[0].mxu0
    %v1646 = vadd.f32 %v281, %v1645
    %v1647 = vpop.f32.mrb[0].mxu0
    %v1648 = vpop.f32.mrb[0].mxu0
    %v1649 = vadd.f32 %v281, %v1648
    %v1650 = vpop.f32.mrb[0].mxu0
    %1651 = vmatprep.mubr.bf16.mxu0 0
    %1652 = vmatmul.mubr.bf16.gmra.mrb[0].mxu0 %v1039
    %v1653 = vpop.f32.mrb[0].mxu0
    %v1654 = vadd.f32 %v281, %v1653
    %v1655 = vpop.f32.mrb[0].mxu0
    %v1656 = vpop.f32.mrb[0].mxu0
    %v1657 = vadd.f32 %v281, %v1656
    %v1658 = vpop.f32.mrb[0].mxu0
    %1659 = vmatprep.mubr.bf16.mxu0 0
    %1660 = vmatmul.mubr.bf16.gmra.mrb[0].mxu0 %v1042
    %v1661 = vpop.f32.mrb[0].mxu0
    %v1662 = vadd.f32 %v281, %v1661
    %v1663 = vpop.f32.mrb[0].mxu0
    %v1664 = vpop.f32.mrb[0].mxu0
    %v1665 = vadd.f32 %v281, %v1664
    %v1666 = vpop.f32.mrb[0].mxu0
    %1667 = vmatprep.mubr.bf16.mxu0 0
    %1668 = vmatmul.mubr.bf16.gmra.mrb[0].mxu0 %v1045
    %v1669 = vpop.f32.mrb[0].mxu0
    %v1670 = vadd.f32 %v281, %v1669
    %v1671 = vpop.f32.mrb[0].mxu0
    %v1672 = vpop.f32.mrb[0].mxu0
    %v1673 = vadd.f32 %v281, %v1672
    %v1674 = vpop.f32.mrb[0].mxu0
    %1675 = vmatprep.mubr.bf16.mxu0 0
    %1676 = vmatmul.mubr.bf16.gmra.mrb[0].mxu0 %v1048
    %v1677 = vpop.f32.mrb[0].mxu0
    %v1678 = vadd.f32 %v281, %v1677
    %v1679 = vpop.f32.mrb[0].mxu0
    %v1680 = vpop.f32.mrb[0].mxu0
    %v1681 = vadd.f32 %v281, %v1680
    %v1682 = vpop.f32.mrb[0].mxu0
    %1683 = vmatprep.mubr.bf16.mxu0 0
    %1684 = vmatmul.mubr.bf16.gmra.mrb[0].mxu0 %v1051
    %v1685 = vpop.f32.mrb[0].mxu0
    %v1686 = vadd.f32 %v281, %v1685
    %v1687 = vpop.f32.mrb[0].mxu0
    %v1688 = vpop.f32.mrb[0].mxu0
    %v1689 = vadd.f32 %v281, %v1688
    %v1690 = vpop.f32.mrb[0].mxu0
    %1691 = vmatprep.mubr.bf16.mxu0 0
    %1692 = vmatmul.mubr.bf16.gmra.mrb[0].mxu0 %v1054
    %v1693 = vpop.f32.mrb[0].mxu0
    %v1694 = vadd.f32 %v281, %v1693
    %v1695 = vpop.f32.mrb[0].mxu0
    %v1696 = vpop.f32.mrb[0].mxu0
    %v1697 = vadd.f32 %v281, %v1696
    %v1698 = vpop.f32.mrb[0].mxu0
    %1699 = vmatprep.mubr.bf16.mxu0 0
    %1700 = vmatmul.mubr.bf16.gmra.mrb[0].mxu0 %v1057
    %v1701 = vpop.f32.mrb[0].mxu0
    %v1702 = vadd.f32 %v281, %v1701
    %v1703 = vpop.f32.mrb[0].mxu0
    %v1704 = vpop.f32.mrb[0].mxu0
    %v1705 = vadd.f32 %v281, %v1704
    %v1706 = vpop.f32.mrb[0].mxu0
    %1707 = vmatprep.mubr.bf16.mxu0 0
    %1708 = vmatmul.mubr.bf16.gmra.mrb[0].mxu0 %v1060
    %v1709 = vpop.f32.mrb[0].mxu0
    %v1710 = vadd.f32 %v281, %v1709
    %v1711 = vpop.f32.mrb[0].mxu0
    %v1712 = vpop.f32.mrb[0].mxu0
    %v1713 = vadd.f32 %v281, %v1712
    %v1714 = vpop.f32.mrb[0].mxu0
    %1715 = vmatprep.mubr.bf16.mxu0 0
    %1716 = vmatmul.mubr.bf16.gmra.mrb[0].mxu0 %v1063
    %v1717 = vpop.f32.mrb[0].mxu0
    %v1718 = vadd.f32 %v281, %v1717
    %v1719 = vpop.f32.mrb[0].mxu0
    %v1720 = vpop.f32.mrb[0].mxu0
    %v1721 = vadd.f32 %v281, %v1720
    %v1722 = vpop.f32.mrb[0].mxu0
    %1723 = vmatprep.mubr.bf16.mxu0 0
    %1724 = vmatmul.mubr.bf16.gmra.mrb[0].mxu0 %v1066
    %v1725 = vpop.f32.mrb[0].mxu0
    %v1726 = vadd.f32 %v281, %v1725
    %v1727 = vpop.f32.mrb[0].mxu0
    %v1728 = vpop.f32.mrb[0].mxu0
    %v1729 = vadd.f32 %v281, %v1728
    %v1730 = vpop.f32.mrb[0].mxu0
    %1731 = vmatprep.mubr.bf16.mxu0 0
    %1732 = vmatmul.mubr.bf16.gmra.mrb[0].mxu0 %v1069
    %v1733 = vpop.f32.mrb[0].mxu0
    %v1734 = vadd.f32 %v281, %v1733
    %v1735 = vpop.f32.mrb[0].mxu0
    %v1736 = vpop.f32.mrb[0].mxu0
    %v1737 = vadd.f32 %v281, %v1736
    %v1738 = vpop.f32.mrb[0].mxu0
    %1739 = vmatprep.mubr.bf16.mxu0 0
    %1740 = vmatmul.mubr.bf16.gmra.mrb[0].mxu0 %v1072
    %v1741 = vpop.f32.mrb[0].mxu0
    %v1742 = vadd.f32 %v281, %v1741
    %v1743 = vpop.f32.mrb[0].mxu0
    %v1744 = vpop.f32.mrb[0].mxu0
    %v1745 = vadd.f32 %v281, %v1744
    %v1746 = vpop.f32.mrb[0].mxu0
    %1747 = vmatprep.mubr.bf16.mxu0 0
    %1748 = vmatmul.mubr.bf16.gmra.mrb[0].mxu0 %v1075
    %v1749 = vpop.f32.mrb[0].mxu0
    %v1750 = vadd.f32 %v281, %v1749
    %v1751 = vpop.f32.mrb[0].mxu0
    %v1752 = vpop.f32.mrb[0].mxu0
    %v1753 = vadd.f32 %v281, %v1752
    %v1754 = vpop.f32.mrb[0].mxu0
    %1755 = vmatprep.mubr.bf16.mxu0 0
    %1756 = vmatmul.mubr.bf16.gmra.mrb[0].mxu0 %v1078
    %v1757 = vpop.f32.mrb[0].mxu0
    %v1758 = vadd.f32 %v281, %v1757
    %v1759 = vpop.f32.mrb[0].mxu0
    %v1760 = vpop.f32.mrb[0].mxu0
    %v1761 = vadd.f32 %v281, %v1760
    %v1762 = vpop.f32.mrb[0].mxu0
    %1763 = vmatprep.mubr.bf16.mxu0 0
    %1764 = vmatmul.mubr.bf16.gmra.mrb[0].mxu0 %v1081
    %v1765 = vpop.f32.mrb[0].mxu0
    %v1766 = vadd.f32 %v281, %v1765
    %v1767 = vpop.f32.mrb[0].mxu0
    %v1768 = vpop.f32.mrb[0].mxu0
    %v1769 = vadd.f32 %v281, %v1768
    %v1770 = vpop.f32.mrb[0].mxu0
    %1771 = vmatprep.mubr.bf16.mxu0 0
    %1772 = vmatmul.mubr.bf16.gmra.mrb[0].mxu0 %v1084
    %v1773 = vpop.f32.mrb[0].mxu0
    %v1774 = vadd.f32 %v281, %v1773
    %v1775 = vpop.f32.mrb[0].mxu0
    %v1776 = vpop.f32.mrb[0].mxu0
    %v1777 = vadd.f32 %v281, %v1776
    %v1778 = vpop.f32.mrb[0].mxu0
    %1779 = vmatprep.mubr.bf16.mxu0 0
    %1780 = vmatmul.mubr.bf16.gmra.mrb[0].mxu0 %v1087
    %v1781 = vpop.f32.mrb[0].mxu0
    %v1782 = vadd.f32 %v281, %v1781
    %v1783 = vpop.f32.mrb[0].mxu0
    %v1784 = vpop.f32.mrb[0].mxu0
    %v1785 = vadd.f32 %v281, %v1784
    %v1786 = vpop.f32.mrb[0].mxu0
    %1787 = vmatprep.mubr.bf16.mxu0 0
    %1788 = vmatmul.mubr.bf16.gmra.mrb[0].mxu0 %v1090
    %v1789 = vpop.f32.mrb[0].mxu0
    %v1790 = vadd.f32 %v281, %v1789
    %v1791 = vpop.f32.mrb[0].mxu0
    %v1792 = vpop.f32.mrb[0].mxu0
    %v1793 = vadd.f32 %v281, %v1792
    %v1794 = vpop.f32.mrb[0].mxu0
    %1795 = vmatprep.mubr.bf16.mxu0 0
    %1796 = vmatmul.mubr.bf16.gmra.mrb[0].mxu0 %v1093
    %v1797 = vpop.f32.mrb[0].mxu0
    %v1798 = vadd.f32 %v281, %v1797
    %v1799 = vpop.f32.mrb[0].mxu0
    %v1800 = vpop.f32.mrb[0].mxu0
    %v1801 = vadd.f32 %v281, %v1800
    %v1802 = vpop.f32.mrb[0].mxu0
    %1803 = vmatprep.mubr.bf16.mxu0 0
    %1804 = vmatmul.mubr.bf16.gmra.mrb[0].mxu0 %v1096
    %v1805 = vpop.f32.mrb[0].mxu0
    %v1806 = vadd.f32 %v281, %v1805
    %v1807 = vpop.f32.mrb[0].mxu0
    %v1808 = vpop.f32.mrb[0].mxu0
    %v1809 = vadd.f32 %v281, %v1808
    %v1810 = vpop.f32.mrb[0].mxu0
    %1811 = vmatprep.mubr.bf16.mxu0 0
    %1812 = vmatmul.mubr.bf16.gmra.mrb[0].mxu0 %v1099
    %v1813 = vpop.f32.mrb[0].mxu0
    %v1814 = vadd.f32 %v281, %v1813
    %v1815 = vpop.f32.mrb[0].mxu0
    %v1816 = vpop.f32.mrb[0].mxu0
    %v1817 = vadd.f32 %v281, %v1816
    %v1818 = vpop.f32.mrb[0].mxu0
    %1819 = vmatprep.mubr.bf16.mxu0 0
    %1820 = vmatmul.mubr.bf16.gmra.mrb[0].mxu0 %v1102
    %v1821 = vpop.f32.mrb[0].mxu0
    %v1822 = vadd.f32 %v281, %v1821
    %v1823 = vpop.f32.mrb[0].mxu0
    %v1824 = vpop.f32.mrb[0].mxu0
    %v1825 = vadd.f32 %v281, %v1824
    %v1826 = vpop.f32.mrb[0].mxu0
    %1827 = vmatprep.mubr.bf16.mxu0 0
    %1828 = vmatmul.mubr.bf16.gmra.mrb[0].mxu0 %v1105
    %v1829 = vpop.f32.mrb[0].mxu0
    %v1830 = vadd.f32 %v281, %v1829
    %v1831 = vpop.f32.mrb[0].mxu0
    %v1832 = vpop.f32.mrb[0].mxu0
    %v1833 = vadd.f32 %v281, %v1832
    %v1834 = vpop.f32.mrb[0].mxu0
    %1835 = vmatprep.mubr.bf16.mxu0 0
    %1836 = vmatmul.mubr.bf16.gmra.mrb[0].mxu0 %v1108
    %v1837 = vpop.f32.mrb[0].mxu0
    %v1838 = vadd.f32 %v281, %v1837
    %v1839 = vpop.f32.mrb[0].mxu0
    %v1840 = vpop.f32.mrb[0].mxu0
    %v1841 = vadd.f32 %v281, %v1840
    %v1842 = vpop.f32.mrb[0].mxu0
    %1843 = vmatprep.mubr.bf16.mxu0 0
    %1844 = vmatmul.mubr.bf16.gmra.mrb[0].mxu0 %v1111
    %v1845 = vpop.f32.mrb[0].mxu0
    %v1846 = vadd.f32 %v281, %v1845
    %v1847 = vpop.f32.mrb[0].mxu0
    %v1848 = vpop.f32.mrb[0].mxu0
    %v1849 = vadd.f32 %v281, %v1848
    %v1850 = vpop.f32.mrb[0].mxu0
    %1851 = vmatprep.mubr.bf16.mxu0 0
    %1852 = vmatmul.mubr.bf16.gmra.mrb[0].mxu0 %v1114
    %v1853 = vpop.f32.mrb[0].mxu0
    %v1854 = vadd.f32 %v281, %v1853
    %v1855 = vpop.f32.mrb[0].mxu0
    %v1856 = vpop.f32.mrb[0].mxu0
    %v1857 = vadd.f32 %v281, %v1856
    %v1858 = vpop.f32.mrb[0].mxu0
    %1859 = vmatprep.mubr.bf16.mxu0 0
    %1860 = vmatmul.mubr.bf16.gmra.mrb[0].mxu0 %v1117
    %v1861 = vpop.f32.mrb[0].mxu0
    %v1862 = vadd.f32 %v281, %v1861
    %v1863 = vpop.f32.mrb[0].mxu0
    %v1864 = vpop.f32.mrb[0].mxu0
    %v1865 = vadd.f32 %v281, %v1864
    %v1866 = vpop.f32.mrb[0].mxu0
    %1867 = vmatprep.mubr.bf16.mxu0 0
    %1868 = vmatmul.mubr.bf16.gmra.mrb[0].mxu0 %v1120
    %v1869 = vpop.f32.mrb[0].mxu0
    %v1870 = vadd.f32 %v281, %v1869
    %v1871 = vpop.f32.mrb[0].mxu0
    %v1872 = vpop.f32.mrb[0].mxu0
    %v1873 = vadd.f32 %v281, %v1872
    %v1874 = vpop.f32.mrb[0].mxu0
    %1875 = vmatprep.mubr.bf16.mxu0 0
    %1876 = vmatmul.mubr.bf16.gmra.mrb[0].mxu0 %v1123
    %v1877 = vpop.f32.mrb[0].mxu0
    %v1878 = vadd.f32 %v281, %v1877
    %v1879 = vpop.f32.mrb[0].mxu0
    %v1880 = vpop.f32.mrb[0].mxu0
    %v1881 = vadd.f32 %v281, %v1880
    %v1882 = vpop.f32.mrb[0].mxu0
    %1883 = vmatprep.mubr.bf16.mxu0 0
    %1884 = vmatmul.mubr.bf16.gmra.mrb[0].mxu0 %v1126
    %v1885 = vpop.f32.mrb[0].mxu0
    %v1886 = vadd.f32 %v281, %v1885
    %v1887 = vpop.f32.mrb[0].mxu0
    %v1888 = vpop.f32.mrb[0].mxu0
    %v1889 = vadd.f32 %v281, %v1888
    %v1890 = vpop.f32.mrb[0].mxu0
    %1891 = vmatprep.mubr.bf16.mxu0 0
    %1892 = vmatmul.mubr.bf16.gmra.mrb[0].mxu0 %v1129
    %v1893 = vpop.f32.mrb[0].mxu0
    %v1894 = vadd.f32 %v281, %v1893
    %v1895 = vpop.f32.mrb[0].mxu0
    %v1896 = vpop.f32.mrb[0].mxu0
    %v1897 = vadd.f32 %v281, %v1896
    %v1898 = vpop.f32.mrb[0].mxu0
    %1899 = vmatprep.mubr.bf16.mxu0 0
    %1900 = vmatmul.mubr.bf16.gmra.mrb[0].mxu0 %v1132
    %v1901 = vpop.f32.mrb[0].mxu0
    %v1902 = vadd.f32 %v281, %v1901
    %v1903 = vpop.f32.mrb[0].mxu0
    %v1904 = vpop.f32.mrb[0].mxu0
    %v1905 = vadd.f32 %v281, %v1904
    %v1906 = vpop.f32.mrb[0].mxu0
    %1907 = vmatprep.mubr.bf16.mxu0 0
    %1908 = vmatmul.mubr.bf16.gmra.mrb[0].mxu0 %v1135
    %v1909 = vpop.f32.mrb[0].mxu0
    %v1910 = vadd.f32 %v281, %v1909
    %v1911 = vpop.f32.mrb[0].mxu0
    %v1912 = vpop.f32.mrb[0].mxu0
    %v1913 = vadd.f32 %v281, %v1912
    %v1914 = vpop.f32.mrb[0].mxu0
    %1915 = vmatprep.mubr.bf16.mxu0 0
    %1916 = vmatmul.mubr.bf16.gmra.mrb[0].mxu0 %v1138
    %v1917 = vpop.f32.mrb[0].mxu0
    %v1918 = vadd.f32 %v281, %v1917
    %v1919 = vpop.f32.mrb[0].mxu0
    %v1920 = vpop.f32.mrb[0].mxu0
    %v1921 = vadd.f32 %v281, %v1920
    %v1922 = vpop.f32.mrb[0].mxu0
    %1923 = vmatprep.mubr.bf16.mxu0 0
    %1924 = vmatmul.mubr.bf16.gmra.mrb[0].mxu0 %v1141
    %v1925 = vpop.f32.mrb[0].mxu0
    %v1926 = vadd.f32 %v281, %v1925
    %v1927 = vpop.f32.mrb[0].mxu0
    %v1928 = vpop.f32.mrb[0].mxu0
    %v1929 = vadd.f32 %v281, %v1928
    %v1930 = vpop.f32.mrb[0].mxu0
    %1931 = vmatprep.mubr.bf16.mxu0 0
    %1932 = vmatmul.mubr.bf16.gmra.mrb[0].mxu0 %v1144
    %v1933 = vpop.f32.mrb[0].mxu0
    %v1934 = vadd.f32 %v281, %v1933
    %v1935 = vpop.f32.mrb[0].mxu0
    %v1936 = vpop.f32.mrb[0].mxu0
    %v1937 = vadd.f32 %v281, %v1936
    %v1938 = vpop.f32.mrb[0].mxu0
    %1939 = vmatprep.mubr.bf16.mxu0 0
    %1940 = vmatmul.mubr.bf16.gmra.mrb[0].mxu0 %v1147
    %v1941 = vpop.f32.mrb[0].mxu0
    %v1942 = vadd.f32 %v281, %v1941
    %v1943 = vpop.f32.mrb[0].mxu0
    %v1944 = vpop.f32.mrb[0].mxu0
    %v1945 = vadd.f32 %v281, %v1944
    %v1946 = vpop.f32.mrb[0].mxu0
    %1947 = vmatprep.mubr.bf16.mxu0 0
    %1948 = vmatmul.mubr.bf16.gmra.mrb[0].mxu0 %v1150
    %v1949 = vpop.f32.mrb[0].mxu0
    %v1950 = vadd.f32 %v281, %v1949
    %v1951 = vpop.f32.mrb[0].mxu0
    %v1952 = vpop.f32.mrb[0].mxu0
    %v1953 = vadd.f32 %v281, %v1952
    %v1954 = vpop.f32.mrb[0].mxu0
    %1955 = vmatprep.mubr.bf16.mxu0 0
    %1956 = vmatmul.mubr.bf16.gmra.mrb[0].mxu0 %v1153
    %v1957 = vpop.f32.mrb[0].mxu0
    %v1958 = vadd.f32 %v281, %v1957
    %v1959 = vpop.f32.mrb[0].mxu0
    %v1960 = vpop.f32.mrb[0].mxu0
    %v1961 = vadd.f32 %v281, %v1960
    %v1962 = vpop.f32.mrb[0].mxu0
    %1963 = vmatprep.mubr.bf16.mxu0 0
    %1964 = vmatmul.mubr.bf16.gmra.mrb[0].mxu0 %v1156
    %v1965 = vpop.f32.mrb[0].mxu0
    %v1966 = vadd.f32 %v281, %v1965
    %v1967 = vpop.f32.mrb[0].mxu0
    %v1968 = vpop.f32.mrb[0].mxu0
    %v1969 = vadd.f32 %v281, %v1968
    %v1970 = vpop.f32.mrb[0].mxu0
    %1971 = vmatprep.mubr.bf16.mxu0 0
    %1972 = vmatmul.mubr.bf16.gmra.mrb[0].mxu0 %v1159
    %v1973 = vpop.f32.mrb[0].mxu0
    %v1974 = vadd.f32 %v281, %v1973
    %v1975 = vpop.f32.mrb[0].mxu0
    %v1976 = vpop.f32.mrb[0].mxu0
    %v1977 = vadd.f32 %v281, %v1976
    %v1978 = vpop.f32.mrb[0].mxu0
    %1979 = vmatprep.mubr.bf16.mxu0 0
    %1980 = vmatmul.mubr.bf16.gmra.mrb[0].mxu0 %v1162
    %v1981 = vpop.f32.mrb[0].mxu0
    %v1982 = vadd.f32 %v281, %v1981
    %v1983 = vpop.f32.mrb[0].mxu0
    %v1984 = vpop.f32.mrb[0].mxu0
    %v1985 = vadd.f32 %v281, %v1984
    %v1986 = vpop.f32.mrb[0].mxu0
    %1987 = vmatprep.mubr.bf16.mxu0 0
    %1988 = vmatmul.mubr.bf16.gmra.mrb[0].mxu0 %v1165
    %v1989 = vpop.f32.mrb[0].mxu0
    %v1990 = vadd.f32 %v281, %v1989
    %v1991 = vpop.f32.mrb[0].mxu0
    %v1992 = vpop.f32.mrb[0].mxu0
    %v1993 = vadd.f32 %v281, %v1992
    %v1994 = vpop.f32.mrb[0].mxu0
    %1995 = vmatprep.mubr.bf16.mxu0 0
    %1996 = vmatmul.mubr.bf16.gmra.mrb[0].mxu0 %v1168
    %v1997 = vpop.f32.mrb[0].mxu0
    %v1998 = vadd.f32 %v281, %v1997
    %v1999 = vpop.f32.mrb[0].mxu0
    %v2000 = vpop.f32.mrb[0].mxu0
    %v2001 = vadd.f32 %v281, %v2000
    %v2002 = vpop.f32.mrb[0].mxu0
    %2003 = vmatprep.mubr.bf16.mxu0 0
    %2004 = vmatmul.mubr.bf16.gmra.mrb[0].mxu0 %v1171
    %v2005 = vpop.f32.mrb[0].mxu0
    %v2006 = vadd.f32 %v281, %v2005
    %v2007 = vpop.f32.mrb[0].mxu0
    %v2008 = vpop.f32.mrb[0].mxu0
    %v2009 = vadd.f32 %v281, %v2008
    %v2010 = vpop.f32.mrb[0].mxu0
    %2011 = vmatprep.mubr.bf16.mxu0 0
    %2012 = vmatmul.mubr.bf16.gmra.mrb[0].mxu0 %v1174
    %v2013 = vpop.f32.mrb[0].mxu0
    %v2014 = vadd.f32 %v281, %v2013
    %v2015 = vpop.f32.mrb[0].mxu0
    %v2016 = vpop.f32.mrb[0].mxu0
    %v2017 = vadd.f32 %v281, %v2016
    %v2018 = vpop.f32.mrb[0].mxu0
    %2019 = vmatprep.mubr.bf16.mxu0 0
    %2020 = vmatmul.mubr.bf16.gmra.mrb[0].mxu0 %v1177
    %v2021 = vpop.f32.mrb[0].mxu0
    %v2022 = vadd.f32 %v281, %v2021
    %v2023 = vpop.f32.mrb[0].mxu0
    %v2024 = vpop.f32.mrb[0].mxu0
    %v2025 = vadd.f32 %v281, %v2024
    %v2026 = vpop.f32.mrb[0].mxu0
    %2027 = vmatprep.mubr.bf16.mxu0 0
    %2028 = vmatmul.mubr.bf16.gmra.mrb[0].mxu0 %v1180
    %v2029 = vpop.f32.mrb[0].mxu0
    %v2030 = vadd.f32 %v281, %v2029
    %v2031 = vpop.f32.mrb[0].mxu0
    %v2032 = vpop.f32.mrb[0].mxu0
    %v2033 = vadd.f32 %v281, %v2032
    %v2034 = vpop.f32.mrb[0].mxu0
    %2035 = vmatprep.mubr.bf16.mxu0 0
    %2036 = vmatmul.mubr.bf16.gmra.mrb[0].mxu0 %v1183
    %v2037 = vpop.f32.mrb[0].mxu0
    %v2038 = vadd.f32 %v281, %v2037
    %v2039 = vpop.f32.mrb[0].mxu0
    %v2040 = vpop.f32.mrb[0].mxu0
    %v2041 = vadd.f32 %v281, %v2040
    %v2042 = vpop.f32.mrb[0].mxu0
    %2043 = vmatprep.mubr.bf16.mxu0 0
    %2044 = vmatmul.mubr.bf16.gmra.mrb[0].mxu0 %v1186
    %v2045 = vpop.f32.mrb[0].mxu0
    %v2046 = vadd.f32 %v281, %v2045
    %v2047 = vpop.f32.mrb[0].mxu0
    %v2048 = vpop.f32.mrb[0].mxu0
    %v2049 = vadd.f32 %v281, %v2048
    %v2050 = vpop.f32.mrb[0].mxu0
    %2051 = vmatprep.mubr.bf16.mxu0 0
    %2052 = vmatmul.mubr.bf16.gmra.mrb[0].mxu0 %v1189
    %v2053 = vpop.f32.mrb[0].mxu0
    %v2054 = vadd.f32 %v281, %v2053
    %v2055 = vpop.f32.mrb[0].mxu0
    %v2056 = vpop.f32.mrb[0].mxu0
    %v2057 = vadd.f32 %v281, %v2056
    %v2058 = vpop.f32.mrb[0].mxu0
    %2059 = vmatprep.mubr.bf16.mxu0 0
    %2060 = vmatmul.mubr.bf16.gmra.mrb[0].mxu0 %v1192
    %v2061 = vpop.f32.mrb[0].mxu0
    %v2062 = vadd.f32 %v281, %v2061
    %v2063 = vpop.f32.mrb[0].mxu0
    %v2064 = vpop.f32.mrb[0].mxu0
    %v2065 = vadd.f32 %v281, %v2064
    %v2066 = vpop.f32.mrb[0].mxu0
    %2067 = vmatprep.mubr.bf16.mxu0 0
    %2068 = vmatmul.mubr.bf16.gmra.mrb[0].mxu0 %v1195
    %v2069 = vpop.f32.mrb[0].mxu0
    %v2070 = vadd.f32 %v281, %v2069
    %v2071 = vpop.f32.mrb[0].mxu0
    %v2072 = vpop.f32.mrb[0].mxu0
    %v2073 = vadd.f32 %v281, %v2072
    %v2074 = vpop.f32.mrb[0].mxu0
    %2075 = vmatprep.mubr.bf16.mxu0 0
    %2076 = vmatmul.mubr.bf16.gmra.mrb[0].mxu0 %v1198
    %v2077 = vpop.f32.mrb[0].mxu0
    %v2078 = vadd.f32 %v281, %v2077
    %v2079 = vpop.f32.mrb[0].mxu0
    %v2080 = vpop.f32.mrb[0].mxu0
    %v2081 = vadd.f32 %v281, %v2080
    %v2082 = vpop.f32.mrb[0].mxu0
    %2083 = vmatprep.mubr.bf16.mxu0 0
    %2084 = vmatmul.mubr.bf16.gmra.mrb[0].mxu0 %v1201
    %v2085 = vpop.f32.mrb[0].mxu0
    %v2086 = vadd.f32 %v281, %v2085
    %v2087 = vpop.f32.mrb[0].mxu0
    %v2088 = vpop.f32.mrb[0].mxu0
    %v2089 = vadd.f32 %v281, %v2088
    %v2090 = vpop.f32.mrb[0].mxu0
    %2091 = vmatprep.mubr.bf16.mxu0 0
    %2092 = vmatmul.mubr.bf16.gmra.mrb[0].mxu0 %v1204
    %v2093 = vpop.f32.mrb[0].mxu0
    %v2094 = vadd.f32 %v281, %v2093
    %v2095 = vpop.f32.mrb[0].mxu0
    %v2096 = vpop.f32.mrb[0].mxu0
    %v2097 = vadd.f32 %v281, %v2096
    %v2098 = vpop.f32.mrb[0].mxu0
    %2099 = vmatprep.mubr.bf16.mxu0 0
    %2100 = vmatmul.mubr.bf16.gmra.mrb[0].mxu0 %v1207
    %v2101 = vpop.f32.mrb[0].mxu0
    %v2102 = vadd.f32 %v281, %v2101
    %v2103 = vpop.f32.mrb[0].mxu0
    %v2104 = vpop.f32.mrb[0].mxu0
    %v2105 = vadd.f32 %v281, %v2104
    %v2106 = vpop.f32.mrb[0].mxu0
    %2107 = vmatprep.mubr.bf16.mxu0 0
    %2108 = vmatmul.mubr.bf16.gmra.mrb[0].mxu0 %v1210
    %v2109 = vpop.f32.mrb[0].mxu0
    %v2110 = vadd.f32 %v281, %v2109
    %v2111 = vpop.f32.mrb[0].mxu0
    %v2112 = vpop.f32.mrb[0].mxu0
    %v2113 = vadd.f32 %v281, %v2112
    %v2114 = vpop.f32.mrb[0].mxu0
    %2115 = vmatprep.mubr.bf16.mxu0 0
    %2116 = vmatmul.mubr.bf16.gmra.mrb[0].mxu0 %v1213
    %v2117 = vpop.f32.mrb[0].mxu0
    %v2118 = vadd.f32 %v281, %v2117
    %v2119 = vpop.f32.mrb[0].mxu0
    %v2120 = vpop.f32.mrb[0].mxu0
    %v2121 = vadd.f32 %v281, %v2120
    %v2122 = vpop.f32.mrb[0].mxu0
    %2123 = vmatprep.mubr.bf16.mxu0 0
    %2124 = vmatmul.mubr.bf16.gmra.mrb[0].mxu0 %v1216
    %v2125 = vpop.f32.mrb[0].mxu0
    %v2126 = vadd.f32 %v281, %v2125
    %v2127 = vpop.f32.mrb[0].mxu0
    %v2128 = vpop.f32.mrb[0].mxu0
    %v2129 = vadd.f32 %v281, %v2128
    %v2130 = vpop.f32.mrb[0].mxu0
    %2131 = vmatprep.mubr.bf16.mxu0 0
    %2132 = vmatmul.mubr.bf16.gmra.mrb[0].mxu0 %v1219
    %v2133 = vpop.f32.mrb[0].mxu0
    %v2134 = vadd.f32 %v281, %v2133
    %v2135 = vpop.f32.mrb[0].mxu0
    %v2136 = vpop.f32.mrb[0].mxu0
    %v2137 = vadd.f32 %v281, %v2136
    %v2138 = vpop.f32.mrb[0].mxu0
    %2139 = vmatprep.mubr.bf16.mxu0 0
    %2140 = vmatmul.mubr.bf16.gmra.mrb[0].mxu0 %v1222
    %v2141 = vpop.f32.mrb[0].mxu0
    %v2142 = vadd.f32 %v281, %v2141
    %v2143 = vpop.f32.mrb[0].mxu0
    %v2144 = vpop.f32.mrb[0].mxu0
    %v2145 = vadd.f32 %v281, %v2144
    %v2146 = vpop.f32.mrb[0].mxu0
    %2147 = vmatprep.mubr.bf16.mxu0 0
    %2148 = vmatmul.mubr.bf16.gmra.mrb[0].mxu0 %v1225
    %v2149 = vpop.f32.mrb[0].mxu0
    %v2150 = vadd.f32 %v281, %v2149
    %v2151 = vpop.f32.mrb[0].mxu0
    %v2152 = vpop.f32.mrb[0].mxu0
    %v2153 = vadd.f32 %v281, %v2152
    %v2154 = vpop.f32.mrb[0].mxu0
    %2155 = vmatprep.mubr.bf16.mxu0 0
    %2156 = vmatmul.mubr.bf16.gmra.mrb[0].mxu0 %v1228
    %v2157 = vpop.f32.mrb[0].mxu0
    %v2158 = vadd.f32 %v281, %v2157
    %v2159 = vpop.f32.mrb[0].mxu0
    %v2160 = vpop.f32.mrb[0].mxu0
    %v2161 = vadd.f32 %v281, %v2160
    %v2162 = vpop.f32.mrb[0].mxu0
    %2163 = vmatprep.mubr.bf16.mxu0 0
    %2164 = vmatmul.mubr.bf16.gmra.mrb[0].mxu0 %v1231
    %v2165 = vpop.f32.mrb[0].mxu0
    %v2166 = vadd.f32 %v281, %v2165
    %v2167 = vpop.f32.mrb[0].mxu0
    %v2168 = vpop.f32.mrb[0].mxu0
    %v2169 = vadd.f32 %v281, %v2168
    %v2170 = vpop.f32.mrb[0].mxu0
    %2171 = vmatprep.mubr.bf16.mxu0 0
    %2172 = vmatmul.mubr.bf16.gmra.mrb[0].mxu0 %v1234
    %v2173 = vpop.f32.mrb[0].mxu0
    %v2174 = vadd.f32 %v281, %v2173
    %v2175 = vpop.f32.mrb[0].mxu0
    %v2176 = vpop.f32.mrb[0].mxu0
    %v2177 = vadd.f32 %v281, %v2176
    %v2178 = vpop.f32.mrb[0].mxu0
    %2179 = vmatprep.mubr.bf16.mxu0 0
    %2180 = vmatmul.mubr.bf16.gmra.mrb[0].mxu0 %v1237
    %v2181 = vpop.f32.mrb[0].mxu0
    %v2182 = vadd.f32 %v281, %v2181
    %v2183 = vpop.f32.mrb[0].mxu0
    %v2184 = vpop.f32.mrb[0].mxu0
    %v2185 = vadd.f32 %v281, %v2184
    %v2186 = vpop.f32.mrb[0].mxu0
    %2187 = vmatprep.mubr.bf16.mxu0 0
    %2188 = vmatmul.mubr.bf16.gmra.mrb[0].mxu0 %v1240
    %v2189 = vpop.f32.mrb[0].mxu0
    %v2190 = vadd.f32 %v281, %v2189
    %v2191 = vpop.f32.mrb[0].mxu0
    %v2192 = vpop.f32.mrb[0].mxu0
    %v2193 = vadd.f32 %v281, %v2192
    %v2194 = vpop.f32.mrb[0].mxu0
    %2195 = vmatprep.mubr.bf16.mxu0 0
    %2196 = vmatmul.mubr.bf16.gmra.mrb[0].mxu0 %v1243
    %v2197 = vpop.f32.mrb[0].mxu0
    %v2198 = vadd.f32 %v281, %v2197
    %v2199 = vpop.f32.mrb[0].mxu0
    %v2200 = vpop.f32.mrb[0].mxu0
    %v2201 = vadd.f32 %v281, %v2200
    %v2202 = vpop.f32.mrb[0].mxu0
    %2203 = vmatprep.mubr.bf16.mxu0 0
    %2204 = vmatmul.mubr.bf16.gmra.mrb[0].mxu0 %v1246
    %v2205 = vpop.f32.mrb[0].mxu0
    %v2206 = vadd.f32 %v281, %v2205
    %v2207 = vpop.f32.mrb[0].mxu0
    %v2208 = vpop.f32.mrb[0].mxu0
    %v2209 = vadd.f32 %v281, %v2208
    %v2210 = vpop.f32.mrb[0].mxu0
    %2211 = vmatprep.mubr.bf16.mxu0 0
    %2212 = vmatmul.mubr.bf16.gmra.mrb[0].mxu0 %v1249
    %v2213 = vpop.f32.mrb[0].mxu0
    %v2214 = vadd.f32 %v281, %v2213
    %v2215 = vpop.f32.mrb[0].mxu0
    %v2216 = vpop.f32.mrb[0].mxu0
    %v2217 = vadd.f32 %v281, %v2216
    %v2218 = vpop.f32.mrb[0].mxu0
    %2219 = vmatprep.mubr.bf16.mxu0 0
    %2220 = vmatmul.mubr.bf16.gmra.mrb[0].mxu0 %v1252
    %v2221 = vpop.f32.mrb[0].mxu0
    %v2222 = vadd.f32 %v281, %v2221
    %v2223 = vpop.f32.mrb[0].mxu0
    %v2224 = vpop.f32.mrb[0].mxu0
    %v2225 = vadd.f32 %v281, %v2224
    %v2226 = vpop.f32.mrb[0].mxu0
    %2227 = vmatprep.mubr.bf16.mxu0 0
    %2228 = vmatmul.mubr.bf16.gmra.mrb[0].mxu0 %v1255
    %v2229 = vpop.f32.mrb[0].mxu0
    %v2230 = vadd.f32 %v281, %v2229
    %v2231 = vpop.f32.mrb[0].mxu0
    %v2232 = vpop.f32.mrb[0].mxu0
    %v2233 = vadd.f32 %v281, %v2232
    %v2234 = vpop.f32.mrb[0].mxu0
    %2235 = vmatprep.mubr.bf16.mxu0 0
    %2236 = vmatmul.mubr.bf16.gmra.mrb[0].mxu0 %v1258
    %v2237 = vpop.f32.mrb[0].mxu0
    %v2238 = vadd.f32 %v281, %v2237
    %v2239 = vpop.f32.mrb[0].mxu0
    %v2240 = vpop.f32.mrb[0].mxu0
    %v2241 = vadd.f32 %v281, %v2240
    %v2242 = vpop.f32.mrb[0].mxu0
    %2243 = vmatprep.mubr.bf16.mxu0 0
    %2244 = vmatmul.mubr.bf16.gmra.mrb[0].mxu0 %v1261
    %v2245 = vpop.f32.mrb[0].mxu0
    %v2246 = vadd.f32 %v281, %v2245
    %v2247 = vpop.f32.mrb[0].mxu0
    %v2248 = vpop.f32.mrb[0].mxu0
    %v2249 = vadd.f32 %v281, %v2248
    %v2250 = vpop.f32.mrb[0].mxu0
    %2251 = vmatprep.mubr.bf16.mxu0 0
    %2252 = vmatmul.mubr.bf16.gmra.mrb[0].mxu0 %v1264
    %v2253 = vpop.f32.mrb[0].mxu0
    %v2254 = vadd.f32 %v281, %v2253
    %v2255 = vpop.f32.mrb[0].mxu0
    %v2256 = vpop.f32.mrb[0].mxu0
    %v2257 = vadd.f32 %v281, %v2256
    %v2258 = vpop.f32.mrb[0].mxu0
    %2259 = vmatprep.mubr.bf16.mxu0 0
    %2260 = vmatmul.mubr.bf16.gmra.mrb[0].mxu0 %v1267
    %v2261 = vpop.f32.mrb[0].mxu0
    %v2262 = vadd.f32 %v281, %v2261
    %v2263 = vpop.f32.mrb[0].mxu0
    %v2264 = vpop.f32.mrb[0].mxu0
    %v2265 = vadd.f32 %v281, %v2264
    %v2266 = vpop.f32.mrb[0].mxu0
    %2267 = vmatprep.mubr.bf16.mxu0 0
    %2268 = vmatmul.mubr.bf16.gmra.mrb[0].mxu0 %v1270
    %v2269 = vpop.f32.mrb[0].mxu0
    %v2270 = vadd.f32 %v281, %v2269
    %v2271 = vpop.f32.mrb[0].mxu0
    %v2272 = vpop.f32.mrb[0].mxu0
    %v2273 = vadd.f32 %v281, %v2272
    %v2274 = vpop.f32.mrb[0].mxu0
    %2275 = vmatprep.mubr.bf16.mxu0 0
    %2276 = vmatmul.mubr.bf16.gmra.mrb[0].mxu0 %v1273
    %v2277 = vpop.f32.mrb[0].mxu0
    %v2278 = vadd.f32 %v281, %v2277
    %v2279 = vpop.f32.mrb[0].mxu0
    %v2280 = vpop.f32.mrb[0].mxu0
    %v2281 = vadd.f32 %v281, %v2280
    %v2282 = vpop.f32.mrb[0].mxu0
    %2283 = vmatprep.mubr.bf16.mxu0 0
    %2284 = vmatmul.mubr.bf16.gmra.mrb[0].mxu0 %v1276
    %v2285 = vpop.f32.mrb[0].mxu0
    %v2286 = vadd.f32 %v281, %v2285
    %v2287 = vpop.f32.mrb[0].mxu0
    %v2288 = vpop.f32.mrb[0].mxu0
    %v2289 = vadd.f32 %v281, %v2288
    %v2290 = vpop.f32.mrb[0].mxu0
    %2291 = vmatprep.mubr.bf16.mxu0 0
    %2292 = vmatmul.mubr.bf16.gmra.mrb[0].mxu0 %v1279
    %v2293 = vpop.f32.mrb[0].mxu0
    %v2294 = vadd.f32 %v281, %v2293
    %v2295 = vpop.f32.mrb[0].mxu0
    %v2296 = vpop.f32.mrb[0].mxu0
    %v2297 = vadd.f32 %v281, %v2296
    %v2298 = vpop.f32.mrb[0].mxu0
    %2299 = vmatprep.mubr.bf16.mxu0 0
    %2300 = vmatmul.mubr.bf16.gmra.mrb[0].mxu0 %v1282
    %v2301 = vpop.f32.mrb[0].mxu0
    %v2302 = vadd.f32 %v281, %v2301
    %v2303 = vpop.f32.mrb[0].mxu0
    %v2304 = vpop.f32.mrb[0].mxu0
    %v2305 = vadd.f32 %v281, %v2304
    %v2306 = vpop.f32.mrb[0].mxu0
    %2307 = vmatprep.mubr.bf16.mxu0 0
    %2308 = vmatmul.mubr.bf16.gmra.mrb[0].mxu0 %v1285
    %v2309 = vpop.f32.mrb[0].mxu0
    %v2310 = vadd.f32 %v281, %v2309
    %v2311 = vpop.f32.mrb[0].mxu0
    %v2312 = vpop.f32.mrb[0].mxu0
    %v2313 = vadd.f32 %v281, %v2312
    %v2314 = vpop.f32.mrb[0].mxu0
    %2315 = vmatprep.mubr.bf16.mxu0 0
    %2316 = vmatmul.mubr.bf16.gmra.mrb[0].mxu0 %v1288
    %v2317 = vpop.f32.mrb[0].mxu0
    %v2318 = vadd.f32 %v281, %v2317
    %v2319 = vpop.f32.mrb[0].mxu0
    %v2320 = vpop.f32.mrb[0].mxu0
    %v2321 = vadd.f32 %v281, %v2320
    %v2322 = vpop.f32.mrb[0].mxu0
    %2323 = vmatprep.mubr.bf16.mxu0 0
    %2324 = vmatmul.mubr.bf16.gmra.mrb[0].mxu0 %v1291
    %v2325 = vpop.f32.mrb[0].mxu0
    %v2326 = vadd.f32 %v281, %v2325
    %v2327 = vpop.f32.mrb[0].mxu0
    %v2328 = vpop.f32.mrb[0].mxu0
    %v2329 = vadd.f32 %v281, %v2328
    %v2330 = vpop.f32.mrb[0].mxu0
    %2331 = vmatprep.mubr.bf16.mxu0 0
    %2332 = vmatmul.mubr.bf16.gmra.mrb[0].mxu0 %v1294
    %v2333 = vpop.f32.mrb[0].mxu0
    %v2334 = vadd.f32 %v281, %v2333
    %v2335 = vpop.f32.mrb[0].mxu0
    %v2336 = vpop.f32.mrb[0].mxu0
    %v2337 = vadd.f32 %v281, %v2336
    %v2338 = vpop.f32.mrb[0].mxu0
    %2339 = vmatprep.mubr.bf16.mxu0 0
    %2340 = vmatmul.mubr.bf16.gmra.mrb[0].mxu0 %v1297
    %v2341 = vpop.f32.mrb[0].mxu0
    %v2342 = vadd.f32 %v281, %v2341
    %v2343 = vpop.f32.mrb[0].mxu0
    %v2344 = vpop.f32.mrb[0].mxu0
    %v2345 = vadd.f32 %v281, %v2344
    %v2346 = vpop.f32.mrb[0].mxu0
    %2347 = vmatprep.mubr.bf16.mxu0 0
    %2348 = vmatmul.mubr.bf16.gmra.mrb[0].mxu0 %v1300
    %v2349 = vpop.f32.mrb[0].mxu0
    %v2350 = vadd.f32 %v281, %v2349
    %v2351 = vpop.f32.mrb[0].mxu0
    %v2352 = vpop.f32.mrb[0].mxu0
    %v2353 = vadd.f32 %v281, %v2352
    %v2354 = vpop.f32.mrb[0].mxu0
    %2355 = vmatprep.mubr.bf16.mxu0 0
    %2356 = vmatmul.mubr.bf16.gmra.mrb[0].mxu0 %v1303
    %v2357 = vpop.f32.mrb[0].mxu0
    %v2358 = vadd.f32 %v281, %v2357
    %v2359 = vpop.f32.mrb[0].mxu0
    %v2360 = vpop.f32.mrb[0].mxu0
    %v2361 = vadd.f32 %v281, %v2360
    %v2362 = vpop.f32.mrb[0].mxu0
    %2363 = vmatprep.mubr.bf16.mxu0 0
    %2364 = vmatmul.mubr.bf16.gmra.mrb[0].mxu0 %v1306
    %v2365 = vpop.f32.mrb[0].mxu0
    %v2366 = vadd.f32 %v281, %v2365
    %v2367 = vpop.f32.mrb[0].mxu0
    %v2368 = vpop.f32.mrb[0].mxu0
    %v2369 = vadd.f32 %v281, %v2368
    %v2370 = vpop.f32.mrb[0].mxu0
    %2371 = vdwg.mxu0
    %v2372 = vmax.f32 %v1350, 0.0
    %v2373 = vmax.f32 %v1353, 0.0
    %v2374 = vmax.f32 %v1358, 0.0
    %v2375 = vmax.f32 %v1361, 0.0
    %v2376 = vmax.f32 %v1366, 0.0
    %v2377 = vmax.f32 %v1369, 0.0
    %v2378 = vmax.f32 %v1374, 0.0
    %v2379 = vmax.f32 %v1377, 0.0
    %v2380 = vmax.f32 %v1382, 0.0
    %v2381 = vmax.f32 %v1385, 0.0
    %v2382 = vmax.f32 %v1390, 0.0
    %v2383 = vmax.f32 %v1393, 0.0
    %v2384 = vmax.f32 %v1398, 0.0
    %v2385 = vmax.f32 %v1401, 0.0
    %v2386 = vmax.f32 %v1406, 0.0
    %v2387 = vmax.f32 %v1409, 0.0
    %v2388 = vmax.f32 %v1414, 0.0
    %v2389 = vmax.f32 %v1417, 0.0
    %v2390 = vmax.f32 %v1422, 0.0
    %v2391 = vmax.f32 %v1425, 0.0
    %v2392 = vmax.f32 %v1430, 0.0
    %v2393 = vmax.f32 %v1433, 0.0
    %v2394 = vmax.f32 %v1438, 0.0
    %v2395 = vmax.f32 %v1441, 0.0
    %v2396 = vmax.f32 %v1446, 0.0
    %v2397 = vmax.f32 %v1449, 0.0
    %v2398 = vmax.f32 %v1454, 0.0
    %v2399 = vmax.f32 %v1457, 0.0
    %v2400 = vmax.f32 %v1462, 0.0
    %v2401 = vmax.f32 %v1465, 0.0
    %v2402 = vmax.f32 %v1470, 0.0
    %v2403 = vmax.f32 %v1473, 0.0
    %v2404 = vmax.f32 %v1478, 0.0
    %v2405 = vmax.f32 %v1481, 0.0
    %v2406 = vmax.f32 %v1486, 0.0
    %v2407 = vmax.f32 %v1489, 0.0
    %v2408 = vmax.f32 %v1494, 0.0
    %v2409 = vmax.f32 %v1497, 0.0
    %v2410 = vmax.f32 %v1502, 0.0
    %v2411 = vmax.f32 %v1505, 0.0
    %v2412 = vmax.f32 %v1510, 0.0
    %v2413 = vmax.f32 %v1513, 0.0
    %v2414 = vmax.f32 %v1518, 0.0
    %v2415 = vmax.f32 %v1521, 0.0
    %v2416 = vmax.f32 %v1526, 0.0
    %v2417 = vmax.f32 %v1529, 0.0
    %v2418 = vmax.f32 %v1534, 0.0
    %v2419 = vmax.f32 %v1537, 0.0
    %v2420 = vmax.f32 %v1542, 0.0
    %v2421 = vmax.f32 %v1545, 0.0
    %v2422 = vmax.f32 %v1550, 0.0
    %v2423 = vmax.f32 %v1553, 0.0
    %v2424 = vmax.f32 %v1558, 0.0
    %v2425 = vmax.f32 %v1561, 0.0
    %v2426 = vmax.f32 %v1566, 0.0
    %v2427 = vmax.f32 %v1569, 0.0
    %v2428 = vmax.f32 %v1574, 0.0
    %v2429 = vmax.f32 %v1577, 0.0
    %v2430 = vmax.f32 %v1582, 0.0
    %v2431 = vmax.f32 %v1585, 0.0
    %v2432 = vmax.f32 %v1590, 0.0
    %v2433 = vmax.f32 %v1593, 0.0
    %v2434 = vmax.f32 %v1598, 0.0
    %v2435 = vmax.f32 %v1601, 0.0
    %v2436 = vmax.f32 %v1606, 0.0
    %v2437 = vmax.f32 %v1609, 0.0
    %v2438 = vmax.f32 %v1614, 0.0
    %v2439 = vmax.f32 %v1617, 0.0
    %v2440 = vmax.f32 %v1622, 0.0
    %v2441 = vmax.f32 %v1625, 0.0
    %v2442 = vmax.f32 %v1630, 0.0
    %v2443 = vmax.f32 %v1633, 0.0
    %v2444 = vmax.f32 %v1638, 0.0
    %v2445 = vmax.f32 %v1641, 0.0
    %v2446 = vmax.f32 %v1646, 0.0
    %v2447 = vmax.f32 %v1649, 0.0
    %v2448 = vmax.f32 %v1654, 0.0
    %v2449 = vmax.f32 %v1657, 0.0
    %v2450 = vmax.f32 %v1662, 0.0
    %v2451 = vmax.f32 %v1665, 0.0
    %v2452 = vmax.f32 %v1670, 0.0
    %v2453 = vmax.f32 %v1673, 0.0
    %v2454 = vmax.f32 %v1678, 0.0
    %v2455 = vmax.f32 %v1681, 0.0
    %v2456 = vmax.f32 %v1686, 0.0
    %v2457 = vmax.f32 %v1689, 0.0
    %v2458 = vmax.f32 %v1694, 0.0
    %v2459 = vmax.f32 %v1697, 0.0
    %v2460 = vmax.f32 %v1702, 0.0
    %v2461 = vmax.f32 %v1705, 0.0
    %v2462 = vmax.f32 %v1710, 0.0
    %v2463 = vmax.f32 %v1713, 0.0
    %v2464 = vmax.f32 %v1718, 0.0
    %v2465 = vmax.f32 %v1721, 0.0
    %v2466 = vmax.f32 %v1726, 0.0
    %v2467 = vmax.f32 %v1729, 0.0
    %v2468 = vmax.f32 %v1734, 0.0
    %v2469 = vmax.f32 %v1737, 0.0
    %v2470 = vmax.f32 %v1742, 0.0
    %v2471 = vmax.f32 %v1745, 0.0
    %v2472 = vmax.f32 %v1750, 0.0
    %v2473 = vmax.f32 %v1753, 0.0
    %v2474 = vmax.f32 %v1758, 0.0
    %v2475 = vmax.f32 %v1761, 0.0
    %v2476 = vmax.f32 %v1766, 0.0
    %v2477 = vmax.f32 %v1769, 0.0
    %v2478 = vmax.f32 %v1774, 0.0
    %v2479 = vmax.f32 %v1777, 0.0
    %v2480 = vmax.f32 %v1782, 0.0
    %v2481 = vmax.f32 %v1785, 0.0
    %v2482 = vmax.f32 %v1790, 0.0
    %v2483 = vmax.f32 %v1793, 0.0
    %v2484 = vmax.f32 %v1798, 0.0
    %v2485 = vmax.f32 %v1801, 0.0
    %v2486 = vmax.f32 %v1806, 0.0
    %v2487 = vmax.f32 %v1809, 0.0
    %v2488 = vmax.f32 %v1814, 0.0
    %v2489 = vmax.f32 %v1817, 0.0
    %v2490 = vmax.f32 %v1822, 0.0
    %v2491 = vmax.f32 %v1825, 0.0
    %v2492 = vmax.f32 %v1830, 0.0
    %v2493 = vmax.f32 %v1833, 0.0
    %v2494 = vmax.f32 %v1838, 0.0
    %v2495 = vmax.f32 %v1841, 0.0
    %v2496 = vmax.f32 %v1846, 0.0
    %v2497 = vmax.f32 %v1849, 0.0
    %v2498 = vmax.f32 %v1854, 0.0
    %v2499 = vmax.f32 %v1857, 0.0
    %v2500 = vmax.f32 %v1862, 0.0
    %v2501 = vmax.f32 %v1865, 0.0
    %v2502 = vmax.f32 %v1870, 0.0
    %v2503 = vmax.f32 %v1873, 0.0
    %v2504 = vmax.f32 %v1878, 0.0
    %v2505 = vmax.f32 %v1881, 0.0
    %v2506 = vmax.f32 %v1886, 0.0
    %v2507 = vmax.f32 %v1889, 0.0
    %v2508 = vmax.f32 %v1894, 0.0
    %v2509 = vmax.f32 %v1897, 0.0
    %v2510 = vmax.f32 %v1902, 0.0
    %v2511 = vmax.f32 %v1905, 0.0
    %v2512 = vmax.f32 %v1910, 0.0
    %v2513 = vmax.f32 %v1913, 0.0
    %v2514 = vmax.f32 %v1918, 0.0
    %v2515 = vmax.f32 %v1921, 0.0
    %v2516 = vmax.f32 %v1926, 0.0
    %v2517 = vmax.f32 %v1929, 0.0
    %v2518 = vmax.f32 %v1934, 0.0
    %v2519 = vmax.f32 %v1937, 0.0
    %v2520 = vmax.f32 %v1942, 0.0
    %v2521 = vmax.f32 %v1945, 0.0
    %v2522 = vmax.f32 %v1950, 0.0
    %v2523 = vmax.f32 %v1953, 0.0
    %v2524 = vmax.f32 %v1958, 0.0
    %v2525 = vmax.f32 %v1961, 0.0
    %v2526 = vmax.f32 %v1966, 0.0
    %v2527 = vmax.f32 %v1969, 0.0
    %v2528 = vmax.f32 %v1974, 0.0
    %v2529 = vmax.f32 %v1977, 0.0
    %v2530 = vmax.f32 %v1982, 0.0
    %v2531 = vmax.f32 %v1985, 0.0
    %v2532 = vmax.f32 %v1990, 0.0
    %v2533 = vmax.f32 %v1993, 0.0
    %v2534 = vmax.f32 %v1998, 0.0
    %v2535 = vmax.f32 %v2001, 0.0
    %v2536 = vmax.f32 %v2006, 0.0
    %v2537 = vmax.f32 %v2009, 0.0
    %v2538 = vmax.f32 %v2014, 0.0
    %v2539 = vmax.f32 %v2017, 0.0
    %v2540 = vmax.f32 %v2022, 0.0
    %v2541 = vmax.f32 %v2025, 0.0
    %v2542 = vmax.f32 %v2030, 0.0
    %v2543 = vmax.f32 %v2033, 0.0
    %v2544 = vmax.f32 %v2038, 0.0
    %v2545 = vmax.f32 %v2041, 0.0
    %v2546 = vmax.f32 %v2046, 0.0
    %v2547 = vmax.f32 %v2049, 0.0
    %v2548 = vmax.f32 %v2054, 0.0
    %v2549 = vmax.f32 %v2057, 0.0
    %v2550 = vmax.f32 %v2062, 0.0
    %v2551 = vmax.f32 %v2065, 0.0
    %v2552 = vmax.f32 %v2070, 0.0
    %v2553 = vmax.f32 %v2073, 0.0
    %v2554 = vmax.f32 %v2078, 0.0
    %v2555 = vmax.f32 %v2081, 0.0
    %v2556 = vmax.f32 %v2086, 0.0
    %v2557 = vmax.f32 %v2089, 0.0
    %v2558 = vmax.f32 %v2094, 0.0
    %v2559 = vmax.f32 %v2097, 0.0
    %v2560 = vmax.f32 %v2102, 0.0
    %v2561 = vmax.f32 %v2105, 0.0
    %v2562 = vmax.f32 %v2110, 0.0
    %v2563 = vmax.f32 %v2113, 0.0
    %v2564 = vmax.f32 %v2118, 0.0
    %v2565 = vmax.f32 %v2121, 0.0
    %v2566 = vmax.f32 %v2126, 0.0
    %v2567 = vmax.f32 %v2129, 0.0
    %v2568 = vmax.f32 %v2134, 0.0
    %v2569 = vmax.f32 %v2137, 0.0
    %v2570 = vmax.f32 %v2142, 0.0
    %v2571 = vmax.f32 %v2145, 0.0
    %v2572 = vmax.f32 %v2150, 0.0
    %v2573 = vmax.f32 %v2153, 0.0
    %v2574 = vmax.f32 %v2158, 0.0
    %v2575 = vmax.f32 %v2161, 0.0
    %v2576 = vmax.f32 %v2166, 0.0
    %v2577 = vmax.f32 %v2169, 0.0
    %v2578 = vmax.f32 %v2174, 0.0
    %v2579 = vmax.f32 %v2177, 0.0
    %v2580 = vmax.f32 %v2182, 0.0
    %v2581 = vmax.f32 %v2185, 0.0
    %v2582 = vmax.f32 %v2190, 0.0
    %v2583 = vmax.f32 %v2193, 0.0
    %v2584 = vmax.f32 %v2198, 0.0
    %v2585 = vmax.f32 %v2201, 0.0
    %v2586 = vmax.f32 %v2206, 0.0
    %v2587 = vmax.f32 %v2209, 0.0
    %v2588 = vmax.f32 %v2214, 0.0
    %v2589 = vmax.f32 %v2217, 0.0
    %v2590 = vmax.f32 %v2222, 0.0
    %v2591 = vmax.f32 %v2225, 0.0
    %v2592 = vmax.f32 %v2230, 0.0
    %v2593 = vmax.f32 %v2233, 0.0
    %v2594 = vmax.f32 %v2238, 0.0
    %v2595 = vmax.f32 %v2241, 0.0
    %v2596 = vmax.f32 %v2246, 0.0
    %v2597 = vmax.f32 %v2249, 0.0
    %v2598 = vmax.f32 %v2254, 0.0
    %v2599 = vmax.f32 %v2257, 0.0
    %v2600 = vmax.f32 %v2262, 0.0
    %v2601 = vmax.f32 %v2265, 0.0
    %v2602 = vmax.f32 %v2270, 0.0
    %v2603 = vmax.f32 %v2273, 0.0
    %v2604 = vmax.f32 %v2278, 0.0
    %v2605 = vmax.f32 %v2281, 0.0
    %v2606 = vmax.f32 %v2286, 0.0
    %v2607 = vmax.f32 %v2289, 0.0
    %v2608 = vmax.f32 %v2294, 0.0
    %v2609 = vmax.f32 %v2297, 0.0
    %v2610 = vmax.f32 %v2302, 0.0
    %v2611 = vmax.f32 %v2305, 0.0
    %v2612 = vmax.f32 %v2310, 0.0
    %v2613 = vmax.f32 %v2313, 0.0
    %v2614 = vmax.f32 %v2318, 0.0
    %v2615 = vmax.f32 %v2321, 0.0
    %v2616 = vmax.f32 %v2326, 0.0
    %v2617 = vmax.f32 %v2329, 0.0
    %v2618 = vmax.f32 %v2334, 0.0
    %v2619 = vmax.f32 %v2337, 0.0
    %v2620 = vmax.f32 %v2342, 0.0
    %v2621 = vmax.f32 %v2345, 0.0
    %v2622 = vmax.f32 %v2350, 0.0
    %v2623 = vmax.f32 %v2353, 0.0
    %v2624 = vmax.f32 %v2358, 0.0
    %v2625 = vmax.f32 %v2361, 0.0
    %v2626 = vmax.f32 %v2366, 0.0
    %v2627 = vmax.f32 %v2369, 0.0
    %v2628 = vadd.f32 %v2372, %v2373
    %v2629 = vadd.f32 %v2628, %v2374
    %v2630 = vadd.f32 %v2629, %v2375
    %v2631 = vadd.f32 %v2630, %v2376
    %v2632 = vadd.f32 %v2631, %v2377
    %v2633 = vadd.f32 %v2632, %v2378
    %v2634 = vadd.f32 %v2633, %v2379
    %v2635 = vadd.f32 %v2634, %v2380
    %v2636 = vadd.f32 %v2635, %v2381
    %v2637 = vadd.f32 %v2636, %v2382
    %v2638 = vadd.f32 %v2637, %v2383
    %v2639 = vadd.f32 %v2638, %v2384
    %v2640 = vadd.f32 %v2639, %v2385
    %v2641 = vadd.f32 %v2640, %v2386
    %v2642 = vadd.f32 %v2641, %v2387
    %v2643 = vadd.f32 %v2642, %v2388
    %v2644 = vadd.f32 %v2643, %v2389
    %v2645 = vadd.f32 %v2644, %v2390
    %v2646 = vadd.f32 %v2645, %v2391
    %v2647 = vadd.f32 %v2646, %v2392
    %v2648 = vadd.f32 %v2647, %v2393
    %v2649 = vadd.f32 %v2648, %v2394
    %v2650 = vadd.f32 %v2649, %v2395
    %v2651 = vadd.f32 %v2650, %v2396
    %v2652 = vadd.f32 %v2651, %v2397
    %v2653 = vadd.f32 %v2652, %v2398
    %v2654 = vadd.f32 %v2653, %v2399
    %v2655 = vadd.f32 %v2654, %v2400
    %v2656 = vadd.f32 %v2655, %v2401
    %v2657 = vadd.f32 %v2656, %v2402
    %v2658 = vadd.f32 %v2657, %v2403
    %v2659 = vrot.slane %v2658, 4
    %v2660 = vadd.f32 %v2658, %v2659
    %v2661 = vrot.slane %v2660, 2
    %v2662 = vadd.f32 %v2660, %v2661
    %v2663 = vrot.slane %v2662, 1
    %v2664 = vadd.f32 %v2662, %v2663
    %v2665 = vadd.f32 %v2404, %v2405
    %v2666 = vadd.f32 %v2665, %v2406
    %v2667 = vadd.f32 %v2666, %v2407
    %v2668 = vadd.f32 %v2667, %v2408
    %v2669 = vadd.f32 %v2668, %v2409
    %v2670 = vadd.f32 %v2669, %v2410
    %v2671 = vadd.f32 %v2670, %v2411
    %v2672 = vadd.f32 %v2671, %v2412
    %v2673 = vadd.f32 %v2672, %v2413
    %v2674 = vadd.f32 %v2673, %v2414
    %v2675 = vadd.f32 %v2674, %v2415
    %v2676 = vadd.f32 %v2675, %v2416
    %v2677 = vadd.f32 %v2676, %v2417
    %v2678 = vadd.f32 %v2677, %v2418
    %v2679 = vadd.f32 %v2678, %v2419
    %v2680 = vadd.f32 %v2679, %v2420
    %v2681 = vadd.f32 %v2680, %v2421
    %v2682 = vadd.f32 %v2681, %v2422
    %v2683 = vadd.f32 %v2682, %v2423
    %v2684 = vadd.f32 %v2683, %v2424
    %v2685 = vadd.f32 %v2684, %v2425
    %v2686 = vadd.f32 %v2685, %v2426
    %v2687 = vadd.f32 %v2686, %v2427
    %v2688 = vadd.f32 %v2687, %v2428
    %v2689 = vadd.f32 %v2688, %v2429
    %v2690 = vadd.f32 %v2689, %v2430
    %v2691 = vadd.f32 %v2690, %v2431
    %v2692 = vadd.f32 %v2691, %v2432
    %v2693 = vadd.f32 %v2692, %v2433
    %v2694 = vadd.f32 %v2693, %v2434
    %v2695 = vadd.f32 %v2694, %v2435
    %v2696 = vrot.slane %v2695, 4
    %v2697 = vadd.f32 %v2695, %v2696
    %v2698 = vrot.slane %v2697, 2
    %v2699 = vadd.f32 %v2697, %v2698
    %v2700 = vrot.slane %v2699, 1
    %v2701 = vadd.f32 %v2699, %v2700
    %v2702 = vadd.f32 %v2436, %v2437
    %v2703 = vadd.f32 %v2702, %v2438
    %v2704 = vadd.f32 %v2703, %v2439
    %v2705 = vadd.f32 %v2704, %v2440
    %v2706 = vadd.f32 %v2705, %v2441
    %v2707 = vadd.f32 %v2706, %v2442
    %v2708 = vadd.f32 %v2707, %v2443
    %v2709 = vadd.f32 %v2708, %v2444
    %v2710 = vadd.f32 %v2709, %v2445
    %v2711 = vadd.f32 %v2710, %v2446
    %v2712 = vadd.f32 %v2711, %v2447
    %v2713 = vadd.f32 %v2712, %v2448
    %v2714 = vadd.f32 %v2713, %v2449
    %v2715 = vadd.f32 %v2714, %v2450
    %v2716 = vadd.f32 %v2715, %v2451
    %v2717 = vadd.f32 %v2716, %v2452
    %v2718 = vadd.f32 %v2717, %v2453
    %v2719 = vadd.f32 %v2718, %v2454
    %v2720 = vadd.f32 %v2719, %v2455
    %v2721 = vadd.f32 %v2720, %v2456
    %v2722 = vadd.f32 %v2721, %v2457
    %v2723 = vadd.f32 %v2722, %v2458
    %v2724 = vadd.f32 %v2723, %v2459
    %v2725 = vadd.f32 %v2724, %v2460
    %v2726 = vadd.f32 %v2725, %v2461
    %v2727 = vadd.f32 %v2726, %v2462
    %v2728 = vadd.f32 %v2727, %v2463
    %v2729 = vadd.f32 %v2728, %v2464
    %v2730 = vadd.f32 %v2729, %v2465
    %v2731 = vadd.f32 %v2730, %v2466
    %v2732 = vadd.f32 %v2731, %v2467
    %v2733 = vrot.slane %v2732, 4
    %v2734 = vadd.f32 %v2732, %v2733
    %v2735 = vrot.slane %v2734, 2
    %v2736 = vadd.f32 %v2734, %v2735
    %v2737 = vrot.slane %v2736, 1
    %v2738 = vadd.f32 %v2736, %v2737
    %v2739 = vadd.f32 %v2468, %v2469
    %v2740 = vadd.f32 %v2739, %v2470
    %v2741 = vadd.f32 %v2740, %v2471
    %v2742 = vadd.f32 %v2741, %v2472
    %v2743 = vadd.f32 %v2742, %v2473
    %v2744 = vadd.f32 %v2743, %v2474
    %v2745 = vadd.f32 %v2744, %v2475
    %v2746 = vadd.f32 %v2745, %v2476
    %v2747 = vadd.f32 %v2746, %v2477
    %v2748 = vadd.f32 %v2747, %v2478
    %v2749 = vadd.f32 %v2748, %v2479
    %v2750 = vadd.f32 %v2749, %v2480
    %v2751 = vadd.f32 %v2750, %v2481
    %v2752 = vadd.f32 %v2751, %v2482
    %v2753 = vadd.f32 %v2752, %v2483
    %v2754 = vadd.f32 %v2753, %v2484
    %v2755 = vadd.f32 %v2754, %v2485
    %v2756 = vadd.f32 %v2755, %v2486
    %v2757 = vadd.f32 %v2756, %v2487
    %v2758 = vadd.f32 %v2757, %v2488
    %v2759 = vadd.f32 %v2758, %v2489
    %v2760 = vadd.f32 %v2759, %v2490
    %v2761 = vadd.f32 %v2760, %v2491
    %v2762 = vadd.f32 %v2761, %v2492
    %v2763 = vadd.f32 %v2762, %v2493
    %v2764 = vadd.f32 %v2763, %v2494
    %v2765 = vadd.f32 %v2764, %v2495
    %v2766 = vadd.f32 %v2765, %v2496
    %v2767 = vadd.f32 %v2766, %v2497
    %v2768 = vadd.f32 %v2767, %v2498
    %v2769 = vadd.f32 %v2768, %v2499
    %v2770 = vrot.slane %v2769, 4
    %v2771 = vadd.f32 %v2769, %v2770
    %v2772 = vrot.slane %v2771, 2
    %v2773 = vadd.f32 %v2771, %v2772
    %v2774 = vrot.slane %v2773, 1
    %v2775 = vadd.f32 %v2773, %v2774
    %v2776 = vadd.f32 %v2500, %v2501
    %v2777 = vadd.f32 %v2776, %v2502
    %v2778 = vadd.f32 %v2777, %v2503
    %v2779 = vadd.f32 %v2778, %v2504
    %v2780 = vadd.f32 %v2779, %v2505
    %v2781 = vadd.f32 %v2780, %v2506
    %v2782 = vadd.f32 %v2781, %v2507
    %v2783 = vadd.f32 %v2782, %v2508
    %v2784 = vadd.f32 %v2783, %v2509
    %v2785 = vadd.f32 %v2784, %v2510
    %v2786 = vadd.f32 %v2785, %v2511
    %v2787 = vadd.f32 %v2786, %v2512
    %v2788 = vadd.f32 %v2787, %v2513
    %v2789 = vadd.f32 %v2788, %v2514
    %v2790 = vadd.f32 %v2789, %v2515
    %v2791 = vadd.f32 %v2790, %v2516
    %v2792 = vadd.f32 %v2791, %v2517
    %v2793 = vadd.f32 %v2792, %v2518
    %v2794 = vadd.f32 %v2793, %v2519
    %v2795 = vadd.f32 %v2794, %v2520
    %v2796 = vadd.f32 %v2795, %v2521
    %v2797 = vadd.f32 %v2796, %v2522
    %v2798 = vadd.f32 %v2797, %v2523
    %v2799 = vadd.f32 %v2798, %v2524
    %v2800 = vadd.f32 %v2799, %v2525
    %v2801 = vadd.f32 %v2800, %v2526
    %v2802 = vadd.f32 %v2801, %v2527
    %v2803 = vadd.f32 %v2802, %v2528
    %v2804 = vadd.f32 %v2803, %v2529
    %v2805 = vadd.f32 %v2804, %v2530
    %v2806 = vadd.f32 %v2805, %v2531
    %v2807 = vrot.slane %v2806, 4
    %v2808 = vadd.f32 %v2806, %v2807
    %v2809 = vrot.slane %v2808, 2
    %v2810 = vadd.f32 %v2808, %v2809
    %v2811 = vrot.slane %v2810, 1
    %v2812 = vadd.f32 %v2810, %v2811
    %v2813 = vadd.f32 %v2532, %v2533
    %v2814 = vadd.f32 %v2813, %v2534
    %v2815 = vadd.f32 %v2814, %v2535
    %v2816 = vadd.f32 %v2815, %v2536
    %v2817 = vadd.f32 %v2816, %v2537
    %v2818 = vadd.f32 %v2817, %v2538
    %v2819 = vadd.f32 %v2818, %v2539
    %v2820 = vadd.f32 %v2819, %v2540
    %v2821 = vadd.f32 %v2820, %v2541
    %v2822 = vadd.f32 %v2821, %v2542
    %v2823 = vadd.f32 %v2822, %v2543
    %v2824 = vadd.f32 %v2823, %v2544
    %v2825 = vadd.f32 %v2824, %v2545
    %v2826 = vadd.f32 %v2825, %v2546
    %v2827 = vadd.f32 %v2826, %v2547
    %v2828 = vadd.f32 %v2827, %v2548
    %v2829 = vadd.f32 %v2828, %v2549
    %v2830 = vadd.f32 %v2829, %v2550
    %v2831 = vadd.f32 %v2830, %v2551
    %v2832 = vadd.f32 %v2831, %v2552
    %v2833 = vadd.f32 %v2832, %v2553
    %v2834 = vadd.f32 %v2833, %v2554
    %v2835 = vadd.f32 %v2834, %v2555
    %v2836 = vadd.f32 %v2835, %v2556
    %v2837 = vadd.f32 %v2836, %v2557
    %v2838 = vadd.f32 %v2837, %v2558
    %v2839 = vadd.f32 %v2838, %v2559
    %v2840 = vadd.f32 %v2839, %v2560
    %v2841 = vadd.f32 %v2840, %v2561
    %v2842 = vadd.f32 %v2841, %v2562
    %v2843 = vadd.f32 %v2842, %v2563
    %v2844 = vrot.slane %v2843, 4
    %v2845 = vadd.f32 %v2843, %v2844
    %v2846 = vrot.slane %v2845, 2
    %v2847 = vadd.f32 %v2845, %v2846
    %v2848 = vrot.slane %v2847, 1
    %v2849 = vadd.f32 %v2847, %v2848
    %v2850 = vadd.f32 %v2564, %v2565
    %v2851 = vadd.f32 %v2850, %v2566
    %v2852 = vadd.f32 %v2851, %v2567
    %v2853 = vadd.f32 %v2852, %v2568
    %v2854 = vadd.f32 %v2853, %v2569
    %v2855 = vadd.f32 %v2854, %v2570
    %v2856 = vadd.f32 %v2855, %v2571
    %v2857 = vadd.f32 %v2856, %v2572
    %v2858 = vadd.f32 %v2857, %v2573
    %v2859 = vadd.f32 %v2858, %v2574
    %v2860 = vadd.f32 %v2859, %v2575
    %v2861 = vadd.f32 %v2860, %v2576
    %v2862 = vadd.f32 %v2861, %v2577
    %v2863 = vadd.f32 %v2862, %v2578
    %v2864 = vadd.f32 %v2863, %v2579
    %v2865 = vadd.f32 %v2864, %v2580
    %v2866 = vadd.f32 %v2865, %v2581
    %v2867 = vadd.f32 %v2866, %v2582
    %v2868 = vadd.f32 %v2867, %v2583
    %v2869 = vadd.f32 %v2868, %v2584
    %v2870 = vadd.f32 %v2869, %v2585
    %v2871 = vadd.f32 %v2870, %v2586
    %v2872 = vadd.f32 %v2871, %v2587
    %v2873 = vadd.f32 %v2872, %v2588
    %v2874 = vadd.f32 %v2873, %v2589
    %v2875 = vadd.f32 %v2874, %v2590
    %v2876 = vadd.f32 %v2875, %v2591
    %v2877 = vadd.f32 %v2876, %v2592
    %v2878 = vadd.f32 %v2877, %v2593
    %v2879 = vadd.f32 %v2878, %v2594
    %v2880 = vadd.f32 %v2879, %v2595
    %v2881 = vrot.slane %v2880, 4
    %v2882 = vadd.f32 %v2880, %v2881
    %v2883 = vrot.slane %v2882, 2
    %v2884 = vadd.f32 %v2882, %v2883
    %v2885 = vrot.slane %v2884, 1
    %v2886 = vadd.f32 %v2884, %v2885
    %v2887 = vadd.f32 %v2596, %v2597
    %v2888 = vadd.f32 %v2887, %v2598
    %v2889 = vadd.f32 %v2888, %v2599
    %v2890 = vadd.f32 %v2889, %v2600
    %v2891 = vadd.f32 %v2890, %v2601
    %v2892 = vadd.f32 %v2891, %v2602
    %v2893 = vadd.f32 %v2892, %v2603
    %v2894 = vadd.f32 %v2893, %v2604
    %v2895 = vadd.f32 %v2894, %v2605
    %v2896 = vadd.f32 %v2895, %v2606
    %v2897 = vadd.f32 %v2896, %v2607
    %v2898 = vadd.f32 %v2897, %v2608
    %v2899 = vadd.f32 %v2898, %v2609
    %v2900 = vadd.f32 %v2899, %v2610
    %v2901 = vadd.f32 %v2900, %v2611
    %v2902 = vadd.f32 %v2901, %v2612
    %v2903 = vadd.f32 %v2902, %v2613
    %v2904 = vadd.f32 %v2903, %v2614
    %v2905 = vadd.f32 %v2904, %v2615
    %v2906 = vadd.f32 %v2905, %v2616
    %v2907 = vadd.f32 %v2906, %v2617
    %v2908 = vadd.f32 %v2907, %v2618
    %v2909 = vadd.f32 %v2908, %v2619
    %v2910 = vadd.f32 %v2909, %v2620
    %v2911 = vadd.f32 %v2910, %v2621
    %v2912 = vadd.f32 %v2911, %v2622
    %v2913 = vadd.f32 %v2912, %v2623
    %v2914 = vadd.f32 %v2913, %v2624
    %v2915 = vadd.f32 %v2914, %v2625
    %v2916 = vadd.f32 %v2915, %v2626
    %v2917 = vadd.f32 %v2916, %v2627
    %v2918 = vrot.slane %v2917, 4
    %v2919 = vadd.f32 %v2917, %v2918
    %v2920 = vrot.slane %v2919, 2
    %v2921 = vadd.f32 %v2919, %v2920
    %v2922 = vrot.slane %v2921, 1
    %v2923 = vadd.f32 %v2921, %v2922
    %v2924 = vmul.f32 %v2664, 0.00390625
    %v2925 = vmul.f32 %v2701, 0.00390625
    %v2926 = vmul.f32 %v2738, 0.00390625
    %v2927 = vmul.f32 %v2775, 0.00390625
    %v2928 = vmul.f32 %v2812, 0.00390625
    %v2929 = vmul.f32 %v2849, 0.00390625
    %v2930 = vmul.f32 %v2886, 0.00390625
    %v2931 = vmul.f32 %v2923, 0.00390625
    %vm2940 = vcmask 1041409
    %v2941 = vsel %vm2940, %v2925, %v2924
    %vm2942 = vcmask 1042434
    %v2943 = vsel %vm2942, %v2926, %v2941
    %vm2944 = vcmask 1043459
    %v2945 = vsel %vm2944, %v2927, %v2943
    %vm2946 = vcmask 1044484
    %v2947 = vsel %vm2946, %v2928, %v2945
    %vm2948 = vcmask 1045509
    %v2949 = vsel %vm2948, %v2929, %v2947
    %vm2950 = vcmask 1046534
    %v2951 = vsel %vm2950, %v2930, %v2949
    %vm2952 = vcmask 1047559
    %v2953 = vsel %vm2952, %v2931, %v2951
    %2955 = vst [vmem:[#allocation2] sm:$0xff] %v2953
    // Predicated region
    $region14: #{tpu_custom_call.1} parent=1 // pred_check
      _
    $region15: #{tpu_custom_call.1} parent=1 // pred_check_branch
      %2957 = sbr.rel (0) target = $region17
    $region16: #{tpu_custom_call.1} parent=1 // pred_region
      %s2959 = ssub.s32 128, 128
      %2960 = vsyncadd [#allocation3], %s2959
      %s2962 = sshll.u32 [#allocation2], 4
      %s2963 = int_to_ptr.vmem [resolvable:$true] %s2962
      %2965 = dma.vmem_to_hbm [thread:$0]  %s2963, 128, %s3, [#allocation3]
    $region17: #{tpu_custom_call.1} parent=1 // pred_fallthru
      _
    // Predicated region
    $region18: #{tpu_custom_call.1} parent=1 // pred_check
      _
    $region19: #{tpu_custom_call.1} parent=1 // pred_check_branch
      %2967 = sbr.rel (0) target = $region21
    $region20: #{tpu_custom_call.1} parent=1 // pred_region
      %2968 = dma.done [#allocation3], 128
    $region21: #{tpu_custom_call.1} parent=1 // pred_fallthru
      _
    %2969 = vsyncpa [#allocation3], 1

</llo_original>
